<compile_context>
chip_gen: v7x
topology: tpu7x:2x2x1
jax: 0.10.0
libtpu: 0.0.40
codegen_flags: <defaults>
</compile_context>

<pallas_src>
import jax
import jax.numpy as jnp
from jax.experimental import pallas as pl
from jax.experimental.pallas import tpu as pltpu

# ---------------- small synthetic CLIP-vision config ----------------
B = 2          # batch
C = 3          # input channels
IMG = 16       # image size
PATCH = 8      # patch size
GRID = IMG // PATCH
NUM_PATCHES = GRID * GRID          # 4
SEQ = NUM_PATCHES + 1              # +1 CLS token = 5
CPP = C * PATCH * PATCH            # 192
D = 64                             # hidden size
HEADS = 2
HEAD_DIM = D // HEADS              # 32
INTER = 128                        # MLP intermediate
LAYERS = 2
SCALE = HEAD_DIM ** -0.5
LN_EPS = 1e-5


# ---------------- fused Pallas kernel ----------------
def _clip_vision_kernel(x_ref, cls_pos_ref, patch_w_ref, prepost_ref, ln_ref,
                        qkvw_ref, qkvb_ref, ow_ref, ob_ref,
                        fc1w_ref, fc1b_ref, fc2w_ref, fc2b_ref,
                        hidden_ref, pooled_ref):
    """Processes one image (one grid step) end to end, weights VMEM-resident."""

    def ln(x, g, b):
        mean = jnp.mean(x, axis=-1, keepdims=True)
        var = jnp.mean(jnp.square(x - mean), axis=-1, keepdims=True)
        return (x - mean) * jax.lax.rsqrt(var + LN_EPS) * g + b

    def mm(x, w_bf16, bias=None):
        # bf16 MXU operands, f32 accumulation; elementwise epilogue in f32.
        y = jnp.dot(x.astype(jnp.bfloat16), w_bf16, preferred_element_type=jnp.float32)
        if bias is not None:
            y = y + bias
        return y

    # ---- patch embedding + class embedding + positional embedding ----
    # x_ref[0] is (SEQ, CPP) with row 0 all-zero, so row 0 of the matmul is 0 and
    # cls_pos row 0 (= class_emb + pos_emb[0]) supplies the CLS token.
    tokens = x_ref[0]                                           # (SEQ, CPP) f32
    h = mm(tokens, patch_w_ref[...]) + cls_pos_ref[...]         # (SEQ, D) f32

    pp = prepost_ref[...]                                       # (4, D): pre_g, pre_b, post_g, post_b
    h = ln(h, pp[0:1], pp[1:2])                                 # pre-layernorm

    # ---- encoder layers (unrolled Python loop; LAYERS is small & static) ----
    for li in range(LAYERS):
        lnp = ln_ref[li]                                        # (4, D): ln1_g, ln1_b, ln2_g, ln2_b

        # --- self-attention block ---
        residual = h
        hn = ln(h, lnp[0:1], lnp[1:2])
        qkv = mm(hn, qkvw_ref[li], qkvb_ref[li])                # (SEQ, 3D); q pre-scaled by SCALE
        q = qkv[:, 0:D]
        k = qkv[:, D:2 * D]
        v = qkv[:, 2 * D:3 * D]

        head_outs = []
        for hd in range(HEADS):                                 # unrolled, HEADS is static
            lo, hi = hd * HEAD_DIM, (hd + 1) * HEAD_DIM
            qh, kh, vh = q[:, lo:hi], k[:, lo:hi], v[:, lo:hi]
            # scores: contract over head_dim without transposing k
            s = jax.lax.dot_general(qh, kh, (((1,), (1,)), ((), ())),
                                    preferred_element_type=jnp.float32)   # (SEQ, SEQ)
            s = s - jnp.max(s, axis=-1, keepdims=True)
            p = jnp.exp(s)
            p = p * pl.reciprocal(jnp.sum(p, axis=-1, keepdims=True), approx=True)
            head_outs.append(jnp.dot(p, vh, preferred_element_type=jnp.float32))
        attn = jnp.concatenate(head_outs, axis=-1)              # (SEQ, D)

        # out-proj with fused residual add
        h = residual + mm(attn, ow_ref[li], ob_ref[li])

        # --- MLP block ---
        residual = h
        hn = ln(h, lnp[2:3], lnp[3:4])
        m = mm(hn, fc1w_ref[li], fc1b_ref[li])
        m = m * jax.nn.sigmoid(1.702 * m)                       # quick_gelu (EUP logistic, f32)
        h = residual + mm(m, fc2w_ref[li], fc2b_ref[li])        # fused residual add

    # ---- outputs ----
    hidden_ref[...] = h[None].astype(hidden_ref.dtype)                    # (1, SEQ, D)
    pooled = ln(h[0:1, :], pp[2:3], pp[3:4])                              # post-LN on CLS token
    pooled_ref[...] = pooled[None].astype(pooled_ref.dtype)               # (1, 1, D)


# ---------------- parameter init (deterministic, synthetic, HF-style layout) ----------------
def init_params(key):
    def nrm(k, shape, std=0.02):
        return (jax.random.normal(k, shape, jnp.float32) * std).astype(jnp.float32)

    keys = jax.random.split(key, 8 + LAYERS)
    params = {
        "patch_w": nrm(keys[0], (CPP, D)),                    # conv weight (bias=False), as matmul
        "class_emb": nrm(keys[1], (D,)),
        "pos_emb": nrm(keys[2], (SEQ, D)),
        "pre_ln_g": jnp.ones((D,), jnp.float32),
        "pre_ln_b": jnp.zeros((D,), jnp.float32),
        "post_ln_g": jnp.ones((D,), jnp.float32),
        "post_ln_b": jnp.zeros((D,), jnp.float32),
        "layers": [],
    }
    for li in range(LAYERS):
        lk = jax.random.split(keys[8 + li], 8)
        params["layers"].append({
            "ln1_g": jnp.ones((D,), jnp.float32), "ln1_b": jnp.zeros((D,), jnp.float32),
            "q_w": nrm(lk[0], (D, D)), "q_b": jnp.zeros((D,), jnp.float32),
            "k_w": nrm(lk[1], (D, D)), "k_b": jnp.zeros((D,), jnp.float32),
            "v_w": nrm(lk[2], (D, D)), "v_b": jnp.zeros((D,), jnp.float32),
            "o_w": nrm(lk[3], (D, D)), "o_b": jnp.zeros((D,), jnp.float32),
            "ln2_g": jnp.ones((D,), jnp.float32), "ln2_b": jnp.zeros((D,), jnp.float32),
            "fc1_w": nrm(lk[4], (D, INTER)), "fc1_b": jnp.zeros((INTER,), jnp.float32),
            "fc2_w": nrm(lk[5], (INTER, D)), "fc2_b": jnp.zeros((D,), jnp.float32),
        })
    return params


def pack_params(params):
    """One-time prep: stack per-layer weights, merge QKV, fold SCALE into q, cast matmul weights to bf16."""
    layers = params["layers"]

    def stack(name, dtype=None):
        t = jnp.stack([lp[name] for lp in layers])
        return t if dtype is None else t.astype(dtype)

    q_w = jnp.stack([lp["q_w"] * SCALE for lp in layers])                # fold head_dim**-0.5
    q_b = jnp.stack([lp["q_b"] * SCALE for lp in layers])
    qkv_w = jnp.concatenate([q_w, stack("k_w"), stack("v_w")], axis=-1)  # (L, D, 3D)
    qkv_b = jnp.concatenate([q_b, stack("k_b"), stack("v_b")], axis=-1)  # (L, 3D)

    # row 0 = class_emb + pos_emb[0] (CLS), rows 1.. = pos_emb for patches
    cls_pos = jnp.concatenate(
        [(params["class_emb"] + params["pos_emb"][0])[None, :], params["pos_emb"][1:]], axis=0)

    return {
        "cls_pos": cls_pos.astype(jnp.float32),                                         # (SEQ, D)
        "patch_w": params["patch_w"].astype(jnp.bfloat16),                              # (CPP, D)
        "prepost_ln": jnp.stack([params["pre_ln_g"], params["pre_ln_b"],
                                 params["post_ln_g"], params["post_ln_b"]]),            # (4, D)
        "ln_w": jnp.stack([jnp.stack([lp["ln1_g"], lp["ln1_b"], lp["ln2_g"], lp["ln2_b"]])
                           for lp in layers]),                                          # (L, 4, D)
        "qkv_w": qkv_w.astype(jnp.bfloat16),                                            # (L, D, 3D)
        "qkv_b": qkv_b[:, None, :].astype(jnp.float32),                                 # (L, 1, 3D)
        "o_w": stack("o_w", jnp.bfloat16),                                              # (L, D, D)
        "o_b": stack("o_b")[:, None, :].astype(jnp.float32),                            # (L, 1, D)
        "fc1_w": stack("fc1_w", jnp.bfloat16),                                          # (L, D, INTER)
        "fc1_b": stack("fc1_b")[:, None, :].astype(jnp.float32),                        # (L, 1, INTER)
        "fc2_w": stack("fc2_w", jnp.bfloat16),                                          # (L, INTER, D)
        "fc2_b": stack("fc2_b")[:, None, :].astype(jnp.float32),                        # (L, 1, D)
    }


# ---------------- forward pass (one fused pallas_call) ----------------
def clip_vision_forward(packed, pixel_values):
    """Equivalent of CLIPVisionWrapper.forward with return_dict=False:
    returns (last_hidden_state, pooled_output)."""
    b = pixel_values.shape[0]
    # patch extraction: NCHW -> (B, NUM_PATCHES, C*P*P), then prepend an all-zero CLS row
    x = pixel_values.reshape(b, C, GRID, PATCH, GRID, PATCH)
    x = x.transpose(0, 2, 4, 1, 3, 5).reshape(b, NUM_PATCHES, CPP)
    x = jnp.concatenate([jnp.zeros((b, 1, CPP), x.dtype), x], axis=1)     # (B, SEQ, CPP)

    hidden, pooled = pl.pallas_call(
        _clip_vision_kernel,
        out_shape=(
            jax.ShapeDtypeStruct((b, SEQ, D), jnp.float32),
            jax.ShapeDtypeStruct((b, 1, D), jnp.float32),
        ),
        grid=(b,),
        in_specs=[
            pl.BlockSpec((1, SEQ, CPP), lambda i: (i, 0, 0)),          # per-image tokens
            pl.BlockSpec((SEQ, D), lambda i: (0, 0)),                  # cls+pos embedding
            pl.BlockSpec((CPP, D), lambda i: (0, 0)),                  # patch-embed weight
            pl.BlockSpec((4, D), lambda i: (0, 0)),                    # pre/post LN params
            pl.BlockSpec((LAYERS, 4, D), lambda i: (0, 0, 0)),         # per-layer LN params
            pl.BlockSpec((LAYERS, D, 3 * D), lambda i: (0, 0, 0)),     # merged QKV weight
            pl.BlockSpec((LAYERS, 1, 3 * D), lambda i: (0, 0, 0)),     # merged QKV bias
            pl.BlockSpec((LAYERS, D, D), lambda i: (0, 0, 0)),         # out-proj weight
            pl.BlockSpec((LAYERS, 1, D), lambda i: (0, 0, 0)),         # out-proj bias
            pl.BlockSpec((LAYERS, D, INTER), lambda i: (0, 0, 0)),     # fc1 weight
            pl.BlockSpec((LAYERS, 1, INTER), lambda i: (0, 0, 0)),     # fc1 bias
            pl.BlockSpec((LAYERS, INTER, D), lambda i: (0, 0, 0)),     # fc2 weight
            pl.BlockSpec((LAYERS, 1, D), lambda i: (0, 0, 0)),         # fc2 bias
        ],
        out_specs=(
            pl.BlockSpec((1, SEQ, D), lambda i: (i, 0, 0)),
            pl.BlockSpec((1, 1, D), lambda i: (i, 0, 0)),
        ),
        compiler_params=pltpu.CompilerParams(
            dimension_semantics=("parallel",),
            vmem_limit_bytes=32 * 1024 * 1024,
        ),
    )(x, packed["cls_pos"], packed["patch_w"], packed["prepost_ln"], packed["ln_w"],
      packed["qkv_w"], packed["qkv_b"], packed["o_w"], packed["o_b"],
      packed["fc1_w"], packed["fc1_b"], packed["fc2_w"], packed["fc2_b"])

    return hidden, pooled[:, 0, :]


clip_vision_forward = jax.jit(clip_vision_forward)


# ---------------- pure-JAX reference (f32) for a sanity check ----------------
def _reference_forward(params, pixel_values):
    b = pixel_values.shape[0]
    x = pixel_values.reshape(b, C, GRID, PATCH, GRID, PATCH)
    x = x.transpose(0, 2, 4, 1, 3, 5).reshape(b, NUM_PATCHES, CPP)
    patch_emb = jnp.einsum("bpk,kd->bpd", x, params["patch_w"])
    cls = jnp.broadcast_to(params["class_emb"][None, None, :], (b, 1, D))
    h = jnp.concatenate([cls, patch_emb], axis=1) + params["pos_emb"][None]

    def ln(x_, g, b_):
        mu = x_.mean(-1, keepdims=True)
        var = ((x_ - mu) ** 2).mean(-1, keepdims=True)
        return (x_ - mu) * jax.lax.rsqrt(var + LN_EPS) * g + b_

    h = ln(h, params["pre_ln_g"], params["pre_ln_b"])
    for lp in params["layers"]:
        res = h
        hn = ln(h, lp["ln1_g"], lp["ln1_b"])
        q = (hn @ lp["q_w"] + lp["q_b"]) * SCALE
        k = hn @ lp["k_w"] + lp["k_b"]
        v = hn @ lp["v_w"] + lp["v_b"]
        q = q.reshape(b, SEQ, HEADS, HEAD_DIM).transpose(0, 2, 1, 3)
        k = k.reshape(b, SEQ, HEADS, HEAD_DIM).transpose(0, 2, 1, 3)
        v = v.reshape(b, SEQ, HEADS, HEAD_DIM).transpose(0, 2, 1, 3)
        s = jnp.einsum("bhqd,bhkd->bhqk", q, k)
        p = jax.nn.softmax(s, axis=-1)
        o = jnp.einsum("bhqk,bhkd->bhqd", p, v)
        o = o.transpose(0, 2, 1, 3).reshape(b, SEQ, D)
        h = res + (o @ lp["o_w"] + lp["o_b"])
        res = h
        hn = ln(h, lp["ln2_g"], lp["ln2_b"])
        m = hn @ lp["fc1_w"] + lp["fc1_b"]
        m = m * jax.nn.sigmoid(1.702 * m)
        h = res + (m @ lp["fc2_w"] + lp["fc2_b"])
    pooled = ln(h[:, 0, :], params["post_ln_g"], params["post_ln_b"])
    return h, pooled


if __name__ == "__main__":
    key = jax.random.PRNGKey(0)
    pkey, xkey = jax.random.split(key)
    params = init_params(pkey)
    packed = pack_params(params)
    pixel_values = jax.random.normal(xkey, (B, C, IMG, IMG), jnp.float32)  # NCHW

    last_hidden_state, pooled = clip_vision_forward(packed, pixel_values)
    jax.block_until_ready(last_hidden_state)
    jax.block_until_ready(pooled)

    assert last_hidden_state.shape == (B, SEQ, D)
    assert pooled.shape == (B, D)

    # numerical sanity check vs. f32 reference (bf16 MXU + approx reciprocal => loose tolerance)
    ref_hidden, ref_pooled = _reference_forward(params, pixel_values)
    assert bool(jnp.all(jnp.isfinite(last_hidden_state))) and bool(jnp.all(jnp.isfinite(pooled)))
    assert bool(jnp.allclose(last_hidden_state, ref_hidden, atol=1e-1, rtol=1e-1))
    assert bool(jnp.allclose(pooled, ref_pooled, atol=1e-1, rtol=1e-1))

    print("KERNEL_OK")
</pallas_src>

<mosaic_0001>
module attributes {stable_mosaic.version = 11 : i64} {
  func.func @_clip_vision_kernel(%arg0: i32, %arg1: memref<1x5x192xf32, #tpu.memory_space<vmem>>, %arg2: memref<5x64xf32, #tpu.memory_space<vmem>>, %arg3: memref<192x64xbf16, #tpu.memory_space<vmem>>, %arg4: memref<4x64xf32, #tpu.memory_space<vmem>>, %arg5: memref<2x4x64xf32, #tpu.memory_space<vmem>>, %arg6: memref<2x64x192xbf16, #tpu.memory_space<vmem>>, %arg7: memref<2x1x192xf32, #tpu.memory_space<vmem>>, %arg8: memref<2x64x64xbf16, #tpu.memory_space<vmem>>, %arg9: memref<2x1x64xf32, #tpu.memory_space<vmem>>, %arg10: memref<2x64x128xbf16, #tpu.memory_space<vmem>>, %arg11: memref<2x1x128xf32, #tpu.memory_space<vmem>>, %arg12: memref<2x128x64xbf16, #tpu.memory_space<vmem>>, %arg13: memref<2x1x64xf32, #tpu.memory_space<vmem>>, %arg14: memref<1x5x64xf32, #tpu.memory_space<vmem>>, %arg15: memref<1x1x64xf32, #tpu.memory_space<vmem>>) attributes {dimension_semantics = [#tpu.dimension_semantics<parallel>], iteration_bounds = array<i64: 2>, scalar_prefetch = 0 : i64, scratch_operands = 0 : i64, tpu.core_type = #tpu.core_type<tc>, window_params = [{transform_indices = @transform_0, window_bounds = array<i64: 1, 5, 192>}, {pipeline_mode = #tpu.pipeline_mode<synchronous>, transform_indices = @transform_1, window_bounds = array<i64: 5, 64>}, {pipeline_mode = #tpu.pipeline_mode<synchronous>, transform_indices = @transform_2, window_bounds = array<i64: 192, 64>}, {pipeline_mode = #tpu.pipeline_mode<synchronous>, transform_indices = @transform_3, window_bounds = array<i64: 4, 64>}, {pipeline_mode = #tpu.pipeline_mode<synchronous>, transform_indices = @transform_4, window_bounds = array<i64: 2, 4, 64>}, {pipeline_mode = #tpu.pipeline_mode<synchronous>, transform_indices = @transform_5, window_bounds = array<i64: 2, 64, 192>}, {pipeline_mode = #tpu.pipeline_mode<synchronous>, transform_indices = @transform_6, window_bounds = array<i64: 2, 1, 192>}, {pipeline_mode = #tpu.pipeline_mode<synchronous>, transform_indices = @transform_7, window_bounds = array<i64: 2, 64, 64>}, {pipeline_mode = #tpu.pipeline_mode<synchronous>, transform_indices = @transform_8, window_bounds = array<i64: 2, 1, 64>}, {pipeline_mode = #tpu.pipeline_mode<synchronous>, transform_indices = @transform_9, window_bounds = array<i64: 2, 64, 128>}, {pipeline_mode = #tpu.pipeline_mode<synchronous>, transform_indices = @transform_10, window_bounds = array<i64: 2, 1, 128>}, {pipeline_mode = #tpu.pipeline_mode<synchronous>, transform_indices = @transform_11, window_bounds = array<i64: 2, 128, 64>}, {pipeline_mode = #tpu.pipeline_mode<synchronous>, transform_indices = @transform_12, window_bounds = array<i64: 2, 1, 64>}, {transform_indices = @transform_13, window_bounds = array<i64: 1, 5, 64>}, {transform_indices = @transform_14, window_bounds = array<i64: 1, 1, 64>}]} {
    %c0 = arith.constant 0 : index
    %c0_0 = arith.constant 0 : index
    %c0_1 = arith.constant 0 : index
    %0 = vector.load %arg1[%c0, %c0_0, %c0_1] : memref<1x5x192xf32, #tpu.memory_space<vmem>>, vector<1x5x192xf32>
    %1 = vector.shape_cast %0 : vector<1x5x192xf32> to vector<5x192xf32>
    %c0_2 = arith.constant 0 : index
    %c0_3 = arith.constant 0 : index
    %2 = vector.load %arg3[%c0_2, %c0_3] : memref<192x64xbf16, #tpu.memory_space<vmem>>, vector<192x64xbf16>
    %3 = arith.truncf %1 : vector<5x192xf32> to vector<5x192xbf16>
    %cst = arith.constant dense<0.000000e+00> : vector<5x64xf32>
    %4 = tpu.matmul %3, %2, %cst {dimension_numbers = #tpu.dot_dimension_numbers<[1], [0], [0], [1], [0, 0, 1, 1], [], []>} : vector<5x192xbf16>, vector<192x64xbf16>, vector<5x64xf32> -> vector<5x64xf32>
    %c0_4 = arith.constant 0 : index
    %c0_5 = arith.constant 0 : index
    %5 = vector.load %arg2[%c0_4, %c0_5] : memref<5x64xf32, #tpu.memory_space<vmem>>, vector<5x64xf32>
    %6 = arith.addf %4, %5 : vector<5x64xf32>
    %c0_6 = arith.constant 0 : index
    %c0_7 = arith.constant 0 : index
    %7 = vector.load %arg4[%c0_6, %c0_7] : memref<4x64xf32, #tpu.memory_space<vmem>>, vector<4x64xf32>
    %8 = vector.extract_strided_slice %7 {offsets = [0, 0], sizes = [1, 64], strides = [1, 1]} : vector<4x64xf32> to vector<1x64xf32>
    %9 = vector.extract_strided_slice %7 {offsets = [1, 0], sizes = [1, 64], strides = [1, 1]} : vector<4x64xf32> to vector<1x64xf32>
    %cst_8 = arith.constant dense<0.000000e+00> : vector<5xf32>
    %10 = vector.multi_reduction <add>, %6, %cst_8 [1] : vector<5x64xf32> to vector<5xf32>
    %11 = vector.shape_cast %10 : vector<5xf32> to vector<5x1xf32>
    %cst_9 = arith.constant 6.400000e+01 : f32
    %12 = vector.broadcast %cst_9 : f32 to vector<5x1xf32>
    %13 = arith.divf %11, %12 : vector<5x1xf32>
    %14 = vector.broadcast %13 : vector<5x1xf32> to vector<5x64xf32>
    %15 = arith.subf %6, %14 : vector<5x64xf32>
    %16 = arith.mulf %15, %15 : vector<5x64xf32>
    %cst_10 = arith.constant dense<0.000000e+00> : vector<5xf32>
    %17 = vector.multi_reduction <add>, %16, %cst_10 [1] : vector<5x64xf32> to vector<5xf32>
    %18 = vector.shape_cast %17 : vector<5xf32> to vector<5x1xf32>
    %cst_11 = arith.constant 6.400000e+01 : f32
    %19 = vector.broadcast %cst_11 : f32 to vector<5x1xf32>
    %20 = arith.divf %18, %19 : vector<5x1xf32>
    %21 = vector.broadcast %13 : vector<5x1xf32> to vector<5x64xf32>
    %22 = arith.subf %6, %21 : vector<5x64xf32>
    %cst_12 = arith.constant 9.99999974E-6 : f32
    %23 = vector.broadcast %cst_12 : f32 to vector<5x1xf32>
    %24 = arith.addf %20, %23 : vector<5x1xf32>
    %25 = math.rsqrt %24 : vector<5x1xf32>
    %26 = vector.broadcast %25 : vector<5x1xf32> to vector<5x64xf32>
    %27 = arith.mulf %22, %26 : vector<5x64xf32>
    %28 = vector.broadcast %8 : vector<1x64xf32> to vector<5x64xf32>
    %29 = arith.mulf %27, %28 : vector<5x64xf32>
    %30 = vector.broadcast %9 : vector<1x64xf32> to vector<5x64xf32>
    %31 = arith.addf %29, %30 : vector<5x64xf32>
    %c0_13 = arith.constant 0 : index
    %c0_14 = arith.constant 0 : index
    %c0_15 = arith.constant 0 : index
    %32 = vector.load %arg5[%c0_13, %c0_14, %c0_15] : memref<2x4x64xf32, #tpu.memory_space<vmem>>, vector<1x4x64xf32>
    %33 = vector.shape_cast %32 : vector<1x4x64xf32> to vector<4x64xf32>
    %34 = vector.extract_strided_slice %33 {offsets = [0, 0], sizes = [1, 64], strides = [1, 1]} : vector<4x64xf32> to vector<1x64xf32>
    %35 = vector.extract_strided_slice %33 {offsets = [1, 0], sizes = [1, 64], strides = [1, 1]} : vector<4x64xf32> to vector<1x64xf32>
    %cst_16 = arith.constant dense<0.000000e+00> : vector<5xf32>
    %36 = vector.multi_reduction <add>, %31, %cst_16 [1] : vector<5x64xf32> to vector<5xf32>
    %37 = vector.shape_cast %36 : vector<5xf32> to vector<5x1xf32>
    %cst_17 = arith.constant 6.400000e+01 : f32
    %38 = vector.broadcast %cst_17 : f32 to vector<5x1xf32>
    %39 = arith.divf %37, %38 : vector<5x1xf32>
    %40 = vector.broadcast %39 : vector<5x1xf32> to vector<5x64xf32>
    %41 = arith.subf %31, %40 : vector<5x64xf32>
    %42 = arith.mulf %41, %41 : vector<5x64xf32>
    %cst_18 = arith.constant dense<0.000000e+00> : vector<5xf32>
    %43 = vector.multi_reduction <add>, %42, %cst_18 [1] : vector<5x64xf32> to vector<5xf32>
    %44 = vector.shape_cast %43 : vector<5xf32> to vector<5x1xf32>
    %cst_19 = arith.constant 6.400000e+01 : f32
    %45 = vector.broadcast %cst_19 : f32 to vector<5x1xf32>
    %46 = arith.divf %44, %45 : vector<5x1xf32>
    %47 = vector.broadcast %39 : vector<5x1xf32> to vector<5x64xf32>
    %48 = arith.subf %31, %47 : vector<5x64xf32>
    %cst_20 = arith.constant 9.99999974E-6 : f32
    %49 = vector.broadcast %cst_20 : f32 to vector<5x1xf32>
    %50 = arith.addf %46, %49 : vector<5x1xf32>
    %51 = math.rsqrt %50 : vector<5x1xf32>
    %52 = vector.broadcast %51 : vector<5x1xf32> to vector<5x64xf32>
    %53 = arith.mulf %48, %52 : vector<5x64xf32>
    %54 = vector.broadcast %34 : vector<1x64xf32> to vector<5x64xf32>
    %55 = arith.mulf %53, %54 : vector<5x64xf32>
    %56 = vector.broadcast %35 : vector<1x64xf32> to vector<5x64xf32>
    %57 = arith.addf %55, %56 : vector<5x64xf32>
    %c0_21 = arith.constant 0 : index
    %c0_22 = arith.constant 0 : index
    %c0_23 = arith.constant 0 : index
    %58 = vector.load %arg6[%c0_21, %c0_22, %c0_23] : memref<2x64x192xbf16, #tpu.memory_space<vmem>>, vector<1x64x192xbf16>
    %59 = vector.shape_cast %58 : vector<1x64x192xbf16> to vector<64x192xbf16>
    %c0_24 = arith.constant 0 : index
    %c0_25 = arith.constant 0 : index
    %c0_26 = arith.constant 0 : index
    %60 = vector.load %arg7[%c0_24, %c0_25, %c0_26] : memref<2x1x192xf32, #tpu.memory_space<vmem>>, vector<1x1x192xf32>
    %61 = vector.shape_cast %60 : vector<1x1x192xf32> to vector<1x192xf32>
    %62 = arith.truncf %57 : vector<5x64xf32> to vector<5x64xbf16>
    %cst_27 = arith.constant dense<0.000000e+00> : vector<5x192xf32>
    %63 = tpu.matmul %62, %59, %cst_27 {dimension_numbers = #tpu.dot_dimension_numbers<[1], [0], [0], [1], [0, 0, 1, 1], [], []>} : vector<5x64xbf16>, vector<64x192xbf16>, vector<5x192xf32> -> vector<5x192xf32>
    %64 = vector.broadcast %61 : vector<1x192xf32> to vector<5x192xf32>
    %65 = arith.addf %63, %64 : vector<5x192xf32>
    %66 = vector.extract_strided_slice %65 {offsets = [0, 0], sizes = [5, 64], strides = [1, 1]} : vector<5x192xf32> to vector<5x64xf32>
    %67 = vector.extract_strided_slice %65 {offsets = [0, 64], sizes = [5, 64], strides = [1, 1]} : vector<5x192xf32> to vector<5x64xf32>
    %68 = vector.extract_strided_slice %65 {offsets = [0, 128], sizes = [5, 64], strides = [1, 1]} : vector<5x192xf32> to vector<5x64xf32>
    %69 = vector.extract_strided_slice %66 {offsets = [0, 0], sizes = [5, 32], strides = [1, 1]} : vector<5x64xf32> to vector<5x32xf32>
    %70 = vector.extract_strided_slice %67 {offsets = [0, 0], sizes = [5, 32], strides = [1, 1]} : vector<5x64xf32> to vector<5x32xf32>
    %71 = vector.extract_strided_slice %68 {offsets = [0, 0], sizes = [5, 32], strides = [1, 1]} : vector<5x64xf32> to vector<5x32xf32>
    %cst_28 = arith.constant dense<0.000000e+00> : vector<5x5xf32>
    %72 = tpu.matmul %69, %70, %cst_28 {dimension_numbers = #tpu.dot_dimension_numbers<[1], [1], [0], [0], [0, 0, 1, 0], [], []>} : vector<5x32xf32>, vector<5x32xf32>, vector<5x5xf32> -> vector<5x5xf32>
    %cst_29 = arith.constant dense<0xFF800000> : vector<5xf32>
    %73 = vector.multi_reduction <maximumf>, %72, %cst_29 [1] : vector<5x5xf32> to vector<5xf32>
    %74 = vector.shape_cast %73 : vector<5xf32> to vector<5x1xf32>
    %75 = vector.broadcast %74 : vector<5x1xf32> to vector<5x5xf32>
    %76 = arith.subf %72, %75 : vector<5x5xf32>
    %77 = math.exp %76 : vector<5x5xf32>
    %cst_30 = arith.constant dense<0.000000e+00> : vector<5xf32>
    %78 = vector.multi_reduction <add>, %77, %cst_30 [1] : vector<5x5xf32> to vector<5xf32>
    %79 = vector.shape_cast %78 : vector<5xf32> to vector<5x1xf32>
    %80 = tpu.reciprocal %79 {approx = true} : vector<5x1xf32> -> vector<5x1xf32>
    %81 = vector.broadcast %80 : vector<5x1xf32> to vector<5x5xf32>
    %82 = arith.mulf %77, %81 : vector<5x5xf32>
    %cst_31 = arith.constant dense<0.000000e+00> : vector<5x32xf32>
    %83 = tpu.matmul %82, %71, %cst_31 {dimension_numbers = #tpu.dot_dimension_numbers<[1], [0], [0], [1], [0, 0, 1, 1], [], []>} : vector<5x5xf32>, vector<5x32xf32>, vector<5x32xf32> -> vector<5x32xf32>
    %84 = vector.extract_strided_slice %66 {offsets = [0, 32], sizes = [5, 32], strides = [1, 1]} : vector<5x64xf32> to vector<5x32xf32>
    %85 = vector.extract_strided_slice %67 {offsets = [0, 32], sizes = [5, 32], strides = [1, 1]} : vector<5x64xf32> to vector<5x32xf32>
    %86 = vector.extract_strided_slice %68 {offsets = [0, 32], sizes = [5, 32], strides = [1, 1]} : vector<5x64xf32> to vector<5x32xf32>
    %cst_32 = arith.constant dense<0.000000e+00> : vector<5x5xf32>
    %87 = tpu.matmul %84, %85, %cst_32 {dimension_numbers = #tpu.dot_dimension_numbers<[1], [1], [0], [0], [0, 0, 1, 0], [], []>} : vector<5x32xf32>, vector<5x32xf32>, vector<5x5xf32> -> vector<5x5xf32>
    %cst_33 = arith.constant dense<0xFF800000> : vector<5xf32>
    %88 = vector.multi_reduction <maximumf>, %87, %cst_33 [1] : vector<5x5xf32> to vector<5xf32>
    %89 = vector.shape_cast %88 : vector<5xf32> to vector<5x1xf32>
    %90 = vector.broadcast %89 : vector<5x1xf32> to vector<5x5xf32>
    %91 = arith.subf %87, %90 : vector<5x5xf32>
    %92 = math.exp %91 : vector<5x5xf32>
    %cst_34 = arith.constant dense<0.000000e+00> : vector<5xf32>
    %93 = vector.multi_reduction <add>, %92, %cst_34 [1] : vector<5x5xf32> to vector<5xf32>
    %94 = vector.shape_cast %93 : vector<5xf32> to vector<5x1xf32>
    %95 = tpu.reciprocal %94 {approx = true} : vector<5x1xf32> -> vector<5x1xf32>
    %96 = vector.broadcast %95 : vector<5x1xf32> to vector<5x5xf32>
    %97 = arith.mulf %92, %96 : vector<5x5xf32>
    %cst_35 = arith.constant dense<0.000000e+00> : vector<5x32xf32>
    %98 = tpu.matmul %97, %86, %cst_35 {dimension_numbers = #tpu.dot_dimension_numbers<[1], [0], [0], [1], [0, 0, 1, 1], [], []>} : vector<5x5xf32>, vector<5x32xf32>, vector<5x32xf32> -> vector<5x32xf32>
    %99 = tpu.concatenate %83, %98 in 1 : vector<5x32xf32>, vector<5x32xf32> -> vector<5x64xf32>
    %c0_36 = arith.constant 0 : index
    %c0_37 = arith.constant 0 : index
    %c0_38 = arith.constant 0 : index
    %100 = vector.load %arg8[%c0_36, %c0_37, %c0_38] : memref<2x64x64xbf16, #tpu.memory_space<vmem>>, vector<1x64x64xbf16>
    %101 = vector.shape_cast %100 : vector<1x64x64xbf16> to vector<64x64xbf16>
    %c0_39 = arith.constant 0 : index
    %c0_40 = arith.constant 0 : index
    %c0_41 = arith.constant 0 : index
    %102 = vector.load %arg9[%c0_39, %c0_40, %c0_41] : memref<2x1x64xf32, #tpu.memory_space<vmem>>, vector<1x1x64xf32>
    %103 = vector.shape_cast %102 : vector<1x1x64xf32> to vector<1x64xf32>
    %104 = arith.truncf %99 : vector<5x64xf32> to vector<5x64xbf16>
    %cst_42 = arith.constant dense<0.000000e+00> : vector<5x64xf32>
    %105 = tpu.matmul %104, %101, %cst_42 {dimension_numbers = #tpu.dot_dimension_numbers<[1], [0], [0], [1], [0, 0, 1, 1], [], []>} : vector<5x64xbf16>, vector<64x64xbf16>, vector<5x64xf32> -> vector<5x64xf32>
    %106 = vector.broadcast %103 : vector<1x64xf32> to vector<5x64xf32>
    %107 = arith.addf %105, %106 : vector<5x64xf32>
    %108 = arith.addf %31, %107 : vector<5x64xf32>
    %109 = vector.extract_strided_slice %33 {offsets = [2, 0], sizes = [1, 64], strides = [1, 1]} : vector<4x64xf32> to vector<1x64xf32>
    %110 = vector.extract_strided_slice %33 {offsets = [3, 0], sizes = [1, 64], strides = [1, 1]} : vector<4x64xf32> to vector<1x64xf32>
    %cst_43 = arith.constant dense<0.000000e+00> : vector<5xf32>
    %111 = vector.multi_reduction <add>, %108, %cst_43 [1] : vector<5x64xf32> to vector<5xf32>
    %112 = vector.shape_cast %111 : vector<5xf32> to vector<5x1xf32>
    %cst_44 = arith.constant 6.400000e+01 : f32
    %113 = vector.broadcast %cst_44 : f32 to vector<5x1xf32>
    %114 = arith.divf %112, %113 : vector<5x1xf32>
    %115 = vector.broadcast %114 : vector<5x1xf32> to vector<5x64xf32>
    %116 = arith.subf %108, %115 : vector<5x64xf32>
    %117 = arith.mulf %116, %116 : vector<5x64xf32>
    %cst_45 = arith.constant dense<0.000000e+00> : vector<5xf32>
    %118 = vector.multi_reduction <add>, %117, %cst_45 [1] : vector<5x64xf32> to vector<5xf32>
    %119 = vector.shape_cast %118 : vector<5xf32> to vector<5x1xf32>
    %cst_46 = arith.constant 6.400000e+01 : f32
    %120 = vector.broadcast %cst_46 : f32 to vector<5x1xf32>
    %121 = arith.divf %119, %120 : vector<5x1xf32>
    %122 = vector.broadcast %114 : vector<5x1xf32> to vector<5x64xf32>
    %123 = arith.subf %108, %122 : vector<5x64xf32>
    %cst_47 = arith.constant 9.99999974E-6 : f32
    %124 = vector.broadcast %cst_47 : f32 to vector<5x1xf32>
    %125 = arith.addf %121, %124 : vector<5x1xf32>
    %126 = math.rsqrt %125 : vector<5x1xf32>
    %127 = vector.broadcast %126 : vector<5x1xf32> to vector<5x64xf32>
    %128 = arith.mulf %123, %127 : vector<5x64xf32>
    %129 = vector.broadcast %109 : vector<1x64xf32> to vector<5x64xf32>
    %130 = arith.mulf %128, %129 : vector<5x64xf32>
    %131 = vector.broadcast %110 : vector<1x64xf32> to vector<5x64xf32>
    %132 = arith.addf %130, %131 : vector<5x64xf32>
    %c0_48 = arith.constant 0 : index
    %c0_49 = arith.constant 0 : index
    %c0_50 = arith.constant 0 : index
    %133 = vector.load %arg10[%c0_48, %c0_49, %c0_50] : memref<2x64x128xbf16, #tpu.memory_space<vmem>>, vector<1x64x128xbf16>
    %134 = vector.shape_cast %133 : vector<1x64x128xbf16> to vector<64x128xbf16>
    %c0_51 = arith.constant 0 : index
    %c0_52 = arith.constant 0 : index
    %c0_53 = arith.constant 0 : index
    %135 = vector.load %arg11[%c0_51, %c0_52, %c0_53] : memref<2x1x128xf32, #tpu.memory_space<vmem>>, vector<1x1x128xf32>
    %136 = vector.shape_cast %135 : vector<1x1x128xf32> to vector<1x128xf32>
    %137 = arith.truncf %132 : vector<5x64xf32> to vector<5x64xbf16>
    %cst_54 = arith.constant dense<0.000000e+00> : vector<5x128xf32>
    %138 = tpu.matmul %137, %134, %cst_54 {dimension_numbers = #tpu.dot_dimension_numbers<[1], [0], [0], [1], [0, 0, 1, 1], [], []>} : vector<5x64xbf16>, vector<64x128xbf16>, vector<5x128xf32> -> vector<5x128xf32>
    %139 = vector.broadcast %136 : vector<1x128xf32> to vector<5x128xf32>
    %140 = arith.addf %138, %139 : vector<5x128xf32>
    %cst_55 = arith.constant 1.702000e+00 : f32
    %141 = vector.broadcast %cst_55 : f32 to vector<5x128xf32>
    %142 = arith.mulf %141, %140 : vector<5x128xf32>
    %143 = arith.negf %142 : vector<5x128xf32>
    %144 = math.exp %143 : vector<5x128xf32>
    %cst_56 = arith.constant 1.000000e+00 : f32
    %145 = vector.broadcast %cst_56 : f32 to vector<5x128xf32>
    %146 = arith.addf %145, %144 : vector<5x128xf32>
    %147 = arith.divf %145, %146 : vector<5x128xf32>
    %148 = arith.mulf %140, %147 : vector<5x128xf32>
    %c0_57 = arith.constant 0 : index
    %c0_58 = arith.constant 0 : index
    %c0_59 = arith.constant 0 : index
    %149 = vector.load %arg12[%c0_57, %c0_58, %c0_59] : memref<2x128x64xbf16, #tpu.memory_space<vmem>>, vector<1x128x64xbf16>
    %150 = vector.shape_cast %149 : vector<1x128x64xbf16> to vector<128x64xbf16>
    %c0_60 = arith.constant 0 : index
    %c0_61 = arith.constant 0 : index
    %c0_62 = arith.constant 0 : index
    %151 = vector.load %arg13[%c0_60, %c0_61, %c0_62] : memref<2x1x64xf32, #tpu.memory_space<vmem>>, vector<1x1x64xf32>
    %152 = vector.shape_cast %151 : vector<1x1x64xf32> to vector<1x64xf32>
    %153 = arith.truncf %148 : vector<5x128xf32> to vector<5x128xbf16>
    %cst_63 = arith.constant dense<0.000000e+00> : vector<5x64xf32>
    %154 = tpu.matmul %153, %150, %cst_63 {dimension_numbers = #tpu.dot_dimension_numbers<[1], [0], [0], [1], [0, 0, 1, 1], [], []>} : vector<5x128xbf16>, vector<128x64xbf16>, vector<5x64xf32> -> vector<5x64xf32>
    %155 = vector.broadcast %152 : vector<1x64xf32> to vector<5x64xf32>
    %156 = arith.addf %154, %155 : vector<5x64xf32>
    %157 = arith.addf %108, %156 : vector<5x64xf32>
    %c1 = arith.constant 1 : index
    %c0_64 = arith.constant 0 : index
    %c0_65 = arith.constant 0 : index
    %158 = vector.load %arg5[%c1, %c0_64, %c0_65] : memref<2x4x64xf32, #tpu.memory_space<vmem>>, vector<1x4x64xf32>
    %159 = vector.shape_cast %158 : vector<1x4x64xf32> to vector<4x64xf32>
    %160 = vector.extract_strided_slice %159 {offsets = [0, 0], sizes = [1, 64], strides = [1, 1]} : vector<4x64xf32> to vector<1x64xf32>
    %161 = vector.extract_strided_slice %159 {offsets = [1, 0], sizes = [1, 64], strides = [1, 1]} : vector<4x64xf32> to vector<1x64xf32>
    %cst_66 = arith.constant dense<0.000000e+00> : vector<5xf32>
    %162 = vector.multi_reduction <add>, %157, %cst_66 [1] : vector<5x64xf32> to vector<5xf32>
    %163 = vector.shape_cast %162 : vector<5xf32> to vector<5x1xf32>
    %cst_67 = arith.constant 6.400000e+01 : f32
    %164 = vector.broadcast %cst_67 : f32 to vector<5x1xf32>
    %165 = arith.divf %163, %164 : vector<5x1xf32>
    %166 = vector.broadcast %165 : vector<5x1xf32> to vector<5x64xf32>
    %167 = arith.subf %157, %166 : vector<5x64xf32>
    %168 = arith.mulf %167, %167 : vector<5x64xf32>
    %cst_68 = arith.constant dense<0.000000e+00> : vector<5xf32>
    %169 = vector.multi_reduction <add>, %168, %cst_68 [1] : vector<5x64xf32> to vector<5xf32>
    %170 = vector.shape_cast %169 : vector<5xf32> to vector<5x1xf32>
    %cst_69 = arith.constant 6.400000e+01 : f32
    %171 = vector.broadcast %cst_69 : f32 to vector<5x1xf32>
    %172 = arith.divf %170, %171 : vector<5x1xf32>
    %173 = vector.broadcast %165 : vector<5x1xf32> to vector<5x64xf32>
    %174 = arith.subf %157, %173 : vector<5x64xf32>
    %cst_70 = arith.constant 9.99999974E-6 : f32
    %175 = vector.broadcast %cst_70 : f32 to vector<5x1xf32>
    %176 = arith.addf %172, %175 : vector<5x1xf32>
    %177 = math.rsqrt %176 : vector<5x1xf32>
    %178 = vector.broadcast %177 : vector<5x1xf32> to vector<5x64xf32>
    %179 = arith.mulf %174, %178 : vector<5x64xf32>
    %180 = vector.broadcast %160 : vector<1x64xf32> to vector<5x64xf32>
    %181 = arith.mulf %179, %180 : vector<5x64xf32>
    %182 = vector.broadcast %161 : vector<1x64xf32> to vector<5x64xf32>
    %183 = arith.addf %181, %182 : vector<5x64xf32>
    %c1_71 = arith.constant 1 : index
    %c0_72 = arith.constant 0 : index
    %c0_73 = arith.constant 0 : index
    %184 = vector.load %arg6[%c1_71, %c0_72, %c0_73] : memref<2x64x192xbf16, #tpu.memory_space<vmem>>, vector<1x64x192xbf16>
    %185 = vector.shape_cast %184 : vector<1x64x192xbf16> to vector<64x192xbf16>
    %c1_74 = arith.constant 1 : index
    %c0_75 = arith.constant 0 : index
    %c0_76 = arith.constant 0 : index
    %186 = vector.load %arg7[%c1_74, %c0_75, %c0_76] : memref<2x1x192xf32, #tpu.memory_space<vmem>>, vector<1x1x192xf32>
    %187 = vector.shape_cast %186 : vector<1x1x192xf32> to vector<1x192xf32>
    %188 = arith.truncf %183 : vector<5x64xf32> to vector<5x64xbf16>
    %cst_77 = arith.constant dense<0.000000e+00> : vector<5x192xf32>
    %189 = tpu.matmul %188, %185, %cst_77 {dimension_numbers = #tpu.dot_dimension_numbers<[1], [0], [0], [1], [0, 0, 1, 1], [], []>} : vector<5x64xbf16>, vector<64x192xbf16>, vector<5x192xf32> -> vector<5x192xf32>
    %190 = vector.broadcast %187 : vector<1x192xf32> to vector<5x192xf32>
    %191 = arith.addf %189, %190 : vector<5x192xf32>
    %192 = vector.extract_strided_slice %191 {offsets = [0, 0], sizes = [5, 64], strides = [1, 1]} : vector<5x192xf32> to vector<5x64xf32>
    %193 = vector.extract_strided_slice %191 {offsets = [0, 64], sizes = [5, 64], strides = [1, 1]} : vector<5x192xf32> to vector<5x64xf32>
    %194 = vector.extract_strided_slice %191 {offsets = [0, 128], sizes = [5, 64], strides = [1, 1]} : vector<5x192xf32> to vector<5x64xf32>
    %195 = vector.extract_strided_slice %192 {offsets = [0, 0], sizes = [5, 32], strides = [1, 1]} : vector<5x64xf32> to vector<5x32xf32>
    %196 = vector.extract_strided_slice %193 {offsets = [0, 0], sizes = [5, 32], strides = [1, 1]} : vector<5x64xf32> to vector<5x32xf32>
    %197 = vector.extract_strided_slice %194 {offsets = [0, 0], sizes = [5, 32], strides = [1, 1]} : vector<5x64xf32> to vector<5x32xf32>
    %cst_78 = arith.constant dense<0.000000e+00> : vector<5x5xf32>
    %198 = tpu.matmul %195, %196, %cst_78 {dimension_numbers = #tpu.dot_dimension_numbers<[1], [1], [0], [0], [0, 0, 1, 0], [], []>} : vector<5x32xf32>, vector<5x32xf32>, vector<5x5xf32> -> vector<5x5xf32>
    %cst_79 = arith.constant dense<0xFF800000> : vector<5xf32>
    %199 = vector.multi_reduction <maximumf>, %198, %cst_79 [1] : vector<5x5xf32> to vector<5xf32>
    %200 = vector.shape_cast %199 : vector<5xf32> to vector<5x1xf32>
    %201 = vector.broadcast %200 : vector<5x1xf32> to vector<5x5xf32>
    %202 = arith.subf %198, %201 : vector<5x5xf32>
    %203 = math.exp %202 : vector<5x5xf32>
    %cst_80 = arith.constant dense<0.000000e+00> : vector<5xf32>
    %204 = vector.multi_reduction <add>, %203, %cst_80 [1] : vector<5x5xf32> to vector<5xf32>
    %205 = vector.shape_cast %204 : vector<5xf32> to vector<5x1xf32>
    %206 = tpu.reciprocal %205 {approx = true} : vector<5x1xf32> -> vector<5x1xf32>
    %207 = vector.broadcast %206 : vector<5x1xf32> to vector<5x5xf32>
    %208 = arith.mulf %203, %207 : vector<5x5xf32>
    %cst_81 = arith.constant dense<0.000000e+00> : vector<5x32xf32>
    %209 = tpu.matmul %208, %197, %cst_81 {dimension_numbers = #tpu.dot_dimension_numbers<[1], [0], [0], [1], [0, 0, 1, 1], [], []>} : vector<5x5xf32>, vector<5x32xf32>, vector<5x32xf32> -> vector<5x32xf32>
    %210 = vector.extract_strided_slice %192 {offsets = [0, 32], sizes = [5, 32], strides = [1, 1]} : vector<5x64xf32> to vector<5x32xf32>
    %211 = vector.extract_strided_slice %193 {offsets = [0, 32], sizes = [5, 32], strides = [1, 1]} : vector<5x64xf32> to vector<5x32xf32>
    %212 = vector.extract_strided_slice %194 {offsets = [0, 32], sizes = [5, 32], strides = [1, 1]} : vector<5x64xf32> to vector<5x32xf32>
    %cst_82 = arith.constant dense<0.000000e+00> : vector<5x5xf32>
    %213 = tpu.matmul %210, %211, %cst_82 {dimension_numbers = #tpu.dot_dimension_numbers<[1], [1], [0], [0], [0, 0, 1, 0], [], []>} : vector<5x32xf32>, vector<5x32xf32>, vector<5x5xf32> -> vector<5x5xf32>
    %cst_83 = arith.constant dense<0xFF800000> : vector<5xf32>
    %214 = vector.multi_reduction <maximumf>, %213, %cst_83 [1] : vector<5x5xf32> to vector<5xf32>
    %215 = vector.shape_cast %214 : vector<5xf32> to vector<5x1xf32>
    %216 = vector.broadcast %215 : vector<5x1xf32> to vector<5x5xf32>
    %217 = arith.subf %213, %216 : vector<5x5xf32>
    %218 = math.exp %217 : vector<5x5xf32>
    %cst_84 = arith.constant dense<0.000000e+00> : vector<5xf32>
    %219 = vector.multi_reduction <add>, %218, %cst_84 [1] : vector<5x5xf32> to vector<5xf32>
    %220 = vector.shape_cast %219 : vector<5xf32> to vector<5x1xf32>
    %221 = tpu.reciprocal %220 {approx = true} : vector<5x1xf32> -> vector<5x1xf32>
    %222 = vector.broadcast %221 : vector<5x1xf32> to vector<5x5xf32>
    %223 = arith.mulf %218, %222 : vector<5x5xf32>
    %cst_85 = arith.constant dense<0.000000e+00> : vector<5x32xf32>
    %224 = tpu.matmul %223, %212, %cst_85 {dimension_numbers = #tpu.dot_dimension_numbers<[1], [0], [0], [1], [0, 0, 1, 1], [], []>} : vector<5x5xf32>, vector<5x32xf32>, vector<5x32xf32> -> vector<5x32xf32>
    %225 = tpu.concatenate %209, %224 in 1 : vector<5x32xf32>, vector<5x32xf32> -> vector<5x64xf32>
    %c1_86 = arith.constant 1 : index
    %c0_87 = arith.constant 0 : index
    %c0_88 = arith.constant 0 : index
    %226 = vector.load %arg8[%c1_86, %c0_87, %c0_88] : memref<2x64x64xbf16, #tpu.memory_space<vmem>>, vector<1x64x64xbf16>
    %227 = vector.shape_cast %226 : vector<1x64x64xbf16> to vector<64x64xbf16>
    %c1_89 = arith.constant 1 : index
    %c0_90 = arith.constant 0 : index
    %c0_91 = arith.constant 0 : index
    %228 = vector.load %arg9[%c1_89, %c0_90, %c0_91] : memref<2x1x64xf32, #tpu.memory_space<vmem>>, vector<1x1x64xf32>
    %229 = vector.shape_cast %228 : vector<1x1x64xf32> to vector<1x64xf32>
    %230 = arith.truncf %225 : vector<5x64xf32> to vector<5x64xbf16>
    %cst_92 = arith.constant dense<0.000000e+00> : vector<5x64xf32>
    %231 = tpu.matmul %230, %227, %cst_92 {dimension_numbers = #tpu.dot_dimension_numbers<[1], [0], [0], [1], [0, 0, 1, 1], [], []>} : vector<5x64xbf16>, vector<64x64xbf16>, vector<5x64xf32> -> vector<5x64xf32>
    %232 = vector.broadcast %229 : vector<1x64xf32> to vector<5x64xf32>
    %233 = arith.addf %231, %232 : vector<5x64xf32>
    %234 = arith.addf %157, %233 : vector<5x64xf32>
    %235 = vector.extract_strided_slice %159 {offsets = [2, 0], sizes = [1, 64], strides = [1, 1]} : vector<4x64xf32> to vector<1x64xf32>
    %236 = vector.extract_strided_slice %159 {offsets = [3, 0], sizes = [1, 64], strides = [1, 1]} : vector<4x64xf32> to vector<1x64xf32>
    %cst_93 = arith.constant dense<0.000000e+00> : vector<5xf32>
    %237 = vector.multi_reduction <add>, %234, %cst_93 [1] : vector<5x64xf32> to vector<5xf32>
    %238 = vector.shape_cast %237 : vector<5xf32> to vector<5x1xf32>
    %cst_94 = arith.constant 6.400000e+01 : f32
    %239 = vector.broadcast %cst_94 : f32 to vector<5x1xf32>
    %240 = arith.divf %238, %239 : vector<5x1xf32>
    %241 = vector.broadcast %240 : vector<5x1xf32> to vector<5x64xf32>
    %242 = arith.subf %234, %241 : vector<5x64xf32>
    %243 = arith.mulf %242, %242 : vector<5x64xf32>
    %cst_95 = arith.constant dense<0.000000e+00> : vector<5xf32>
    %244 = vector.multi_reduction <add>, %243, %cst_95 [1] : vector<5x64xf32> to vector<5xf32>
    %245 = vector.shape_cast %244 : vector<5xf32> to vector<5x1xf32>
    %cst_96 = arith.constant 6.400000e+01 : f32
    %246 = vector.broadcast %cst_96 : f32 to vector<5x1xf32>
    %247 = arith.divf %245, %246 : vector<5x1xf32>
    %248 = vector.broadcast %240 : vector<5x1xf32> to vector<5x64xf32>
    %249 = arith.subf %234, %248 : vector<5x64xf32>
    %cst_97 = arith.constant 9.99999974E-6 : f32
    %250 = vector.broadcast %cst_97 : f32 to vector<5x1xf32>
    %251 = arith.addf %247, %250 : vector<5x1xf32>
    %252 = math.rsqrt %251 : vector<5x1xf32>
    %253 = vector.broadcast %252 : vector<5x1xf32> to vector<5x64xf32>
    %254 = arith.mulf %249, %253 : vector<5x64xf32>
    %255 = vector.broadcast %235 : vector<1x64xf32> to vector<5x64xf32>
    %256 = arith.mulf %254, %255 : vector<5x64xf32>
    %257 = vector.broadcast %236 : vector<1x64xf32> to vector<5x64xf32>
    %258 = arith.addf %256, %257 : vector<5x64xf32>
    %c1_98 = arith.constant 1 : index
    %c0_99 = arith.constant 0 : index
    %c0_100 = arith.constant 0 : index
    %259 = vector.load %arg10[%c1_98, %c0_99, %c0_100] : memref<2x64x128xbf16, #tpu.memory_space<vmem>>, vector<1x64x128xbf16>
    %260 = vector.shape_cast %259 : vector<1x64x128xbf16> to vector<64x128xbf16>
    %c1_101 = arith.constant 1 : index
    %c0_102 = arith.constant 0 : index
    %c0_103 = arith.constant 0 : index
    %261 = vector.load %arg11[%c1_101, %c0_102, %c0_103] : memref<2x1x128xf32, #tpu.memory_space<vmem>>, vector<1x1x128xf32>
    %262 = vector.shape_cast %261 : vector<1x1x128xf32> to vector<1x128xf32>
    %263 = arith.truncf %258 : vector<5x64xf32> to vector<5x64xbf16>
    %cst_104 = arith.constant dense<0.000000e+00> : vector<5x128xf32>
    %264 = tpu.matmul %263, %260, %cst_104 {dimension_numbers = #tpu.dot_dimension_numbers<[1], [0], [0], [1], [0, 0, 1, 1], [], []>} : vector<5x64xbf16>, vector<64x128xbf16>, vector<5x128xf32> -> vector<5x128xf32>
    %265 = vector.broadcast %262 : vector<1x128xf32> to vector<5x128xf32>
    %266 = arith.addf %264, %265 : vector<5x128xf32>
    %cst_105 = arith.constant 1.702000e+00 : f32
    %267 = vector.broadcast %cst_105 : f32 to vector<5x128xf32>
    %268 = arith.mulf %267, %266 : vector<5x128xf32>
    %269 = arith.negf %268 : vector<5x128xf32>
    %270 = math.exp %269 : vector<5x128xf32>
    %cst_106 = arith.constant 1.000000e+00 : f32
    %271 = vector.broadcast %cst_106 : f32 to vector<5x128xf32>
    %272 = arith.addf %271, %270 : vector<5x128xf32>
    %273 = arith.divf %271, %272 : vector<5x128xf32>
    %274 = arith.mulf %266, %273 : vector<5x128xf32>
    %c1_107 = arith.constant 1 : index
    %c0_108 = arith.constant 0 : index
    %c0_109 = arith.constant 0 : index
    %275 = vector.load %arg12[%c1_107, %c0_108, %c0_109] : memref<2x128x64xbf16, #tpu.memory_space<vmem>>, vector<1x128x64xbf16>
    %276 = vector.shape_cast %275 : vector<1x128x64xbf16> to vector<128x64xbf16>
    %c1_110 = arith.constant 1 : index
    %c0_111 = arith.constant 0 : index
    %c0_112 = arith.constant 0 : index
    %277 = vector.load %arg13[%c1_110, %c0_111, %c0_112] : memref<2x1x64xf32, #tpu.memory_space<vmem>>, vector<1x1x64xf32>
    %278 = vector.shape_cast %277 : vector<1x1x64xf32> to vector<1x64xf32>
    %279 = arith.truncf %274 : vector<5x128xf32> to vector<5x128xbf16>
    %cst_113 = arith.constant dense<0.000000e+00> : vector<5x64xf32>
    %280 = tpu.matmul %279, %276, %cst_113 {dimension_numbers = #tpu.dot_dimension_numbers<[1], [0], [0], [1], [0, 0, 1, 1], [], []>} : vector<5x128xbf16>, vector<128x64xbf16>, vector<5x64xf32> -> vector<5x64xf32>
    %281 = vector.broadcast %278 : vector<1x64xf32> to vector<5x64xf32>
    %282 = arith.addf %280, %281 : vector<5x64xf32>
    %283 = arith.addf %234, %282 : vector<5x64xf32>
    %284 = vector.shape_cast %283 : vector<5x64xf32> to vector<1x5x64xf32>
    %c0_114 = arith.constant 0 : index
    %c0_115 = arith.constant 0 : index
    %c0_116 = arith.constant 0 : index
    %285 = vector.load %arg14[%c0_114, %c0_115, %c0_116] : memref<1x5x64xf32, #tpu.memory_space<vmem>>, vector<1x5x64xf32>
    tpu.vector_store %arg14[%c0_114, %c0_115, %c0_116], %284 {strides = array<i32>} : memref<1x5x64xf32, #tpu.memory_space<vmem>>, vector<1x5x64xf32>,
    %286 = vector.extract_strided_slice %283 {offsets = [0, 0], sizes = [1, 64], strides = [1, 1]} : vector<5x64xf32> to vector<1x64xf32>
    %287 = vector.extract_strided_slice %7 {offsets = [2, 0], sizes = [1, 64], strides = [1, 1]} : vector<4x64xf32> to vector<1x64xf32>
    %288 = vector.extract_strided_slice %7 {offsets = [3, 0], sizes = [1, 64], strides = [1, 1]} : vector<4x64xf32> to vector<1x64xf32>
    %cst_117 = arith.constant dense<0.000000e+00> : vector<1xf32>
    %289 = vector.multi_reduction <add>, %286, %cst_117 [1] : vector<1x64xf32> to vector<1xf32>
    %290 = vector.shape_cast %289 : vector<1xf32> to vector<1x1xf32>
    %cst_118 = arith.constant 6.400000e+01 : f32
    %291 = vector.broadcast %cst_118 : f32 to vector<1x1xf32>
    %292 = arith.divf %290, %291 : vector<1x1xf32>
    %293 = vector.broadcast %292 : vector<1x1xf32> to vector<1x64xf32>
    %294 = arith.subf %286, %293 : vector<1x64xf32>
    %295 = arith.mulf %294, %294 : vector<1x64xf32>
    %cst_119 = arith.constant dense<0.000000e+00> : vector<1xf32>
    %296 = vector.multi_reduction <add>, %295, %cst_119 [1] : vector<1x64xf32> to vector<1xf32>
    %297 = vector.shape_cast %296 : vector<1xf32> to vector<1x1xf32>
    %cst_120 = arith.constant 6.400000e+01 : f32
    %298 = vector.broadcast %cst_120 : f32 to vector<1x1xf32>
    %299 = arith.divf %297, %298 : vector<1x1xf32>
    %300 = vector.broadcast %292 : vector<1x1xf32> to vector<1x64xf32>
    %301 = arith.subf %286, %300 : vector<1x64xf32>
    %cst_121 = arith.constant 9.99999974E-6 : f32
    %302 = vector.broadcast %cst_121 : f32 to vector<1x1xf32>
    %303 = arith.addf %299, %302 : vector<1x1xf32>
    %304 = math.rsqrt %303 : vector<1x1xf32>
    %305 = vector.broadcast %304 : vector<1x1xf32> to vector<1x64xf32>
    %306 = arith.mulf %301, %305 : vector<1x64xf32>
    %307 = arith.mulf %306, %287 : vector<1x64xf32>
    %308 = arith.addf %307, %288 : vector<1x64xf32>
    %309 = vector.shape_cast %308 : vector<1x64xf32> to vector<1x1x64xf32>
    %c0_122 = arith.constant 0 : index
    %c0_123 = arith.constant 0 : index
    %c0_124 = arith.constant 0 : index
    %310 = vector.load %arg15[%c0_122, %c0_123, %c0_124] : memref<1x1x64xf32, #tpu.memory_space<vmem>>, vector<1x1x64xf32>
    tpu.vector_store %arg15[%c0_122, %c0_123, %c0_124], %309 {strides = array<i32>} : memref<1x1x64xf32, #tpu.memory_space<vmem>>, vector<1x1x64xf32>,
    return
  }
  func.func @transform_0(%arg0: i32) -> (i32, i32, i32) {
    %c0_i32 = arith.constant 0 : i32
    %c0_i32_0 = arith.constant 0 : i32
    %c0_i32_1 = arith.constant 0 : i32
    return %arg0, %c0_i32, %c0_i32_0 : i32, i32, i32
  }
  func.func @transform_1(%arg0: i32) -> (i32, i32) {
    %c0_i32 = arith.constant 0 : i32
    %c0_i32_0 = arith.constant 0 : i32
    %c0_i32_1 = arith.constant 0 : i32
    return %c0_i32, %c0_i32_0 : i32, i32
  }
  func.func @transform_2(%arg0: i32) -> (i32, i32) {
    %c0_i32 = arith.constant 0 : i32
    %c0_i32_0 = arith.constant 0 : i32
    %c0_i32_1 = arith.constant 0 : i32
    return %c0_i32, %c0_i32_0 : i32, i32
  }
  func.func @transform_3(%arg0: i32) -> (i32, i32) {
    %c0_i32 = arith.constant 0 : i32
    %c0_i32_0 = arith.constant 0 : i32
    %c0_i32_1 = arith.constant 0 : i32
    return %c0_i32, %c0_i32_0 : i32, i32
  }
  func.func @transform_4(%arg0: i32) -> (i32, i32, i32) {
    %c0_i32 = arith.constant 0 : i32
    %c0_i32_0 = arith.constant 0 : i32
    %c0_i32_1 = arith.constant 0 : i32
    %c0_i32_2 = arith.constant 0 : i32
    return %c0_i32, %c0_i32_0, %c0_i32_1 : i32, i32, i32
  }
  func.func @transform_5(%arg0: i32) -> (i32, i32, i32) {
    %c0_i32 = arith.constant 0 : i32
    %c0_i32_0 = arith.constant 0 : i32
    %c0_i32_1 = arith.constant 0 : i32
    %c0_i32_2 = arith.constant 0 : i32
    return %c0_i32, %c0_i32_0, %c0_i32_1 : i32, i32, i32
  }
  func.func @transform_6(%arg0: i32) -> (i32, i32, i32) {
    %c0_i32 = arith.constant 0 : i32
    %c0_i32_0 = arith.constant 0 : i32
    %c0_i32_1 = arith.constant 0 : i32
    %c0_i32_2 = arith.constant 0 : i32
    return %c0_i32, %c0_i32_0, %c0_i32_1 : i32, i32, i32
  }
  func.func @transform_7(%arg0: i32) -> (i32, i32, i32) {
    %c0_i32 = arith.constant 0 : i32
    %c0_i32_0 = arith.constant 0 : i32
    %c0_i32_1 = arith.constant 0 : i32
    %c0_i32_2 = arith.constant 0 : i32
    return %c0_i32, %c0_i32_0, %c0_i32_1 : i32, i32, i32
  }
  func.func @transform_8(%arg0: i32) -> (i32, i32, i32) {
    %c0_i32 = arith.constant 0 : i32
    %c0_i32_0 = arith.constant 0 : i32
    %c0_i32_1 = arith.constant 0 : i32
    %c0_i32_2 = arith.constant 0 : i32
    return %c0_i32, %c0_i32_0, %c0_i32_1 : i32, i32, i32
  }
  func.func @transform_9(%arg0: i32) -> (i32, i32, i32) {
    %c0_i32 = arith.constant 0 : i32
    %c0_i32_0 = arith.constant 0 : i32
    %c0_i32_1 = arith.constant 0 : i32
    %c0_i32_2 = arith.constant 0 : i32
    return %c0_i32, %c0_i32_0, %c0_i32_1 : i32, i32, i32
  }
  func.func @transform_10(%arg0: i32) -> (i32, i32, i32) {
    %c0_i32 = arith.constant 0 : i32
    %c0_i32_0 = arith.constant 0 : i32
    %c0_i32_1 = arith.constant 0 : i32
    %c0_i32_2 = arith.constant 0 : i32
    return %c0_i32, %c0_i32_0, %c0_i32_1 : i32, i32, i32
  }
  func.func @transform_11(%arg0: i32) -> (i32, i32, i32) {
    %c0_i32 = arith.constant 0 : i32
    %c0_i32_0 = arith.constant 0 : i32
    %c0_i32_1 = arith.constant 0 : i32
    %c0_i32_2 = arith.constant 0 : i32
    return %c0_i32, %c0_i32_0, %c0_i32_1 : i32, i32, i32
  }
  func.func @transform_12(%arg0: i32) -> (i32, i32, i32) {
    %c0_i32 = arith.constant 0 : i32
    %c0_i32_0 = arith.constant 0 : i32
    %c0_i32_1 = arith.constant 0 : i32
    %c0_i32_2 = arith.constant 0 : i32
    return %c0_i32, %c0_i32_0, %c0_i32_1 : i32, i32, i32
  }
  func.func @transform_13(%arg0: i32) -> (i32, i32, i32) {
    %c0_i32 = arith.constant 0 : i32
    %c0_i32_0 = arith.constant 0 : i32
    %c0_i32_1 = arith.constant 0 : i32
    return %arg0, %c0_i32, %c0_i32_0 : i32, i32, i32
  }
  func.func @transform_14(%arg0: i32) -> (i32, i32, i32) {
    %c0_i32 = arith.constant 0 : i32
    %c0_i32_0 = arith.constant 0 : i32
    %c0_i32_1 = arith.constant 0 : i32
    return %arg0, %c0_i32, %c0_i32_0 : i32, i32, i32
  }
}

</mosaic_0001>

<llo_original>
// kernel: clip_vision_forward.1
$region0: #{clip_vision_forward.1}
  #allocation0 [shape = 'u32[]', space=smem, size = 0x4, offset = 0x4, fixed_abs, tag = 'smem constant byte address 0x4 - core index']
  #allocation1 [shape = 'u32[144,128]{1,0:T(1,128)}', space=vmem, size = 0x12000, scoped, tag = 'internal scratch']
  %s0 = inlined_call_operand.vmem [shape: f32[2,5,192], index: 0, kind: input, shape index: {}]
  %s1 = inlined_call_operand.vmem [shape: f32[5,64], index: 1, kind: input, shape index: {}]
  %s2 = inlined_call_operand.vmem [shape: bf16[192,64], index: 2, kind: input, shape index: {}]
  %s3 = inlined_call_operand.vmem [shape: f32[4,64], index: 3, kind: input, shape index: {}]
  %s4 = inlined_call_operand.vmem [shape: f32[2,4,64], index: 4, kind: input, shape index: {}]
  %s5 = inlined_call_operand.vmem [shape: bf16[2,64,192], index: 5, kind: input, shape index: {}]
  %s6 = inlined_call_operand.vmem [shape: f32[2,1,192], index: 6, kind: input, shape index: {}]
  %s7 = inlined_call_operand.vmem [shape: bf16[2,64,64], index: 7, kind: input, shape index: {}]
  %s8 = inlined_call_operand.vmem [shape: f32[2,1,64], index: 8, kind: input, shape index: {}]
  %s9 = inlined_call_operand.vmem [shape: bf16[2,64,128], index: 9, kind: input, shape index: {}]
  %s10 = inlined_call_operand.vmem [shape: f32[2,1,128], index: 10, kind: input, shape index: {}]
  %s11 = inlined_call_operand.vmem [shape: bf16[2,128,64], index: 11, kind: input, shape index: {}]
  %s12 = inlined_call_operand.vmem [shape: f32[2,1,64], index: 12, kind: input, shape index: {}]
  %s13 = inlined_call_operand.vmem [shape: f32[2,5,64], index: 13, kind: output, shape index: {0}]
  %s14 = inlined_call_operand.hbm [shape: f32[2,1,64], index: 14, kind: output, shape index: {1}]
  %15 = xla_tuple %s13, %s14
  %s16 = sld [smem:[#allocation0]]
  $region93: #{clip_vision_forward.1} parent=0
    _
  %s18 = ssub.s32 1, %s16
  %s19 = scalar_select 0, %s18, %s16
  $region1: #{clip_vision_forward.1} parent=0
    #allocation2 [shape = 'u8[1024]{0}', space=vmem, size = 0x400, scoped, tag = 'output window, operand 1']
    #allocation3 [shape = 's32[2]{0}', space=sflag, size = 0x8, scoped, tag = 'scoped memory for clip_vision_forward.1']
    %20 = vsyncpa [#allocation3], 0
    %s21 = scalar_lea.sflag [#allocation3], 1
    %22 = vsyncpa %s21, 0
    loop: start=0, step=1, limit=4
    $region2: #{clip_vision_forward.1} parent=1 // loop_pre_header
      _
    $region3: #{clip_vision_forward.1} parent=1 // loop_header
      %s24 = sphi 0, %s28
      %p25 = scmp.ge.s32.totalorder %s24, 4
      %s34 = sphi 0, %s36
      %s37 = sphi 0, %s34
      %s38 = sphi 0, %s37
      %s54 = sphi 0, %s38
      %s58 = sphi 0, %s58
      %s60 = sphi 0, %s58
      %s61 = sphi 0, %s60
      %s75 = sphi 0, %s61
      %s79 = sphi 0, %s79
      %s81 = sphi 0, %s79
      %s82 = sphi 0, %s81
      %s96 = sphi 0, %s82
      %s100 = sphi 0, %s100
      %s102 = sphi 0, %s100
      %s103 = sphi 0, %s102
      %s117 = sphi 0, %s103
      %s121 = sphi 0, %s121
      %s123 = sphi 0, %s121
      %s124 = sphi 0, %s123
      %s138 = sphi 0, %s124
      %s142 = sphi 0, %s142
      %s144 = sphi 0, %s142
      %s145 = sphi 0, %s144
      %s159 = sphi 0, %s145
      %s163 = sphi 0, %s163
      %s165 = sphi 0, %s163
      %s166 = sphi 0, %s165
      %s180 = sphi 0, %s166
      %s184 = sphi 0, %s184
      %s186 = sphi 0, %s184
      %s187 = sphi 0, %s186
      %s201 = sphi 0, %s187
      %s205 = sphi 0, %s205
      %s207 = sphi 0, %s205
      %s208 = sphi 0, %s207
      %s222 = sphi 0, %s208
      %s226 = sphi 0, %s226
      %s228 = sphi 0, %s226
      %s229 = sphi 0, %s228
      %s243 = sphi 0, %s229
      %s247 = sphi 0, %s247
      %s249 = sphi 0, %s247
      %s250 = sphi 0, %s249
      %s264 = sphi 0, %s250
      %s268 = sphi 0, %s268
      %s270 = sphi 0, %s268
      %s271 = sphi 0, %s270
      %s285 = sphi 0, %s271
      %s289 = sphi 0, %s289
      %s291 = sphi 0, %s289
      %s292 = sphi 0, %s291
      %s306 = sphi 0, %s292
      %s312 = sphi 0, %s314
      %s315 = sphi 0, %s312
      %s316 = sphi 0, %s315
      %s332 = sphi 0, %s316
      %s338 = sphi 0, %s340
      %s341 = sphi 0, %s338
      %s342 = sphi 0, %s341
      %s358 = sphi 0, %s342
    $region4: #{clip_vision_forward.1} parent=1 // loop_header_branch
      %27 = sbr.rel (%p25) target = $region8
    $region5: #{clip_vision_forward.1} parent=1 // loop_body
      %s29 = ssub.s32 %s24, 1
      %s30 = ssub.s32 %s24, 2
      %s31 = sadd.s32 %s24, 1
      %s32 = ssub.s32 %s24, %s31
      %p33 = scmp.eq.s32.totalorder %s32, 0
      %s35 = sadd.s32 %s34, 1
      %s36 = scalar_select %p33, %s34, %s35
      %p39 = pneg %p33
      %p40 = scmp.eq.s32.totalorder %s24, 1
      %p41 = por %p39, %p40
      %p42 = scmp.ne.s32.totalorder %s34, %s37
      %p43 = scmp.eq.s32.totalorder %s24, 0
      %p44 = por %p42, %p43
      %p45 = scmp.ne.s32.totalorder %s34, %s37
      %p46 = scmp.eq.s32.totalorder %s29, 1
      %p47 = por %p45, %p46
      %p48 = scmp.ne.s32.totalorder %s37, %s38
      %p49 = scmp.eq.s32.totalorder %s29, 0
      %p50 = por %p48, %p49
      %p51 = scmp.ne.s32.totalorder %s37, %s38
      %p52 = scmp.eq.s32.totalorder %s30, 1
      %p53 = por %p51, %p52
      %p55 = scmp.ne.s32.totalorder %s38, %s54
      %p56 = scmp.eq.s32.totalorder %s30, 0
      %p57 = por %p55, %p56
      %s59 = sadd.s32 %s58, 1
      %p62 = scmp.eq.s32.totalorder %s24, 1
      %p63 = scmp.ne.s32.totalorder %s58, %s60
      %p64 = scmp.eq.s32.totalorder %s24, 0
      %p65 = por %p63, %p64
      %p66 = scmp.ne.s32.totalorder %s58, %s60
      %p67 = scmp.eq.s32.totalorder %s29, 1
      %p68 = por %p66, %p67
      %p69 = scmp.ne.s32.totalorder %s60, %s61
      %p70 = scmp.eq.s32.totalorder %s29, 0
      %p71 = por %p69, %p70
      %p72 = scmp.ne.s32.totalorder %s60, %s61
      %p73 = scmp.eq.s32.totalorder %s30, 1
      %p74 = por %p72, %p73
      %p76 = scmp.ne.s32.totalorder %s61, %s75
      %p77 = scmp.eq.s32.totalorder %s30, 0
      %p78 = por %p76, %p77
      %s80 = sadd.s32 %s79, 1
      %p83 = scmp.eq.s32.totalorder %s24, 1
      %p84 = scmp.ne.s32.totalorder %s79, %s81
      %p85 = scmp.eq.s32.totalorder %s24, 0
      %p86 = por %p84, %p85
      %p87 = scmp.ne.s32.totalorder %s79, %s81
      %p88 = scmp.eq.s32.totalorder %s29, 1
      %p89 = por %p87, %p88
      %p90 = scmp.ne.s32.totalorder %s81, %s82
      %p91 = scmp.eq.s32.totalorder %s29, 0
      %p92 = por %p90, %p91
      %p93 = scmp.ne.s32.totalorder %s81, %s82
      %p94 = scmp.eq.s32.totalorder %s30, 1
      %p95 = por %p93, %p94
      %p97 = scmp.ne.s32.totalorder %s82, %s96
      %p98 = scmp.eq.s32.totalorder %s30, 0
      %p99 = por %p97, %p98
      %s101 = sadd.s32 %s100, 1
      %p104 = scmp.eq.s32.totalorder %s24, 1
      %p105 = scmp.ne.s32.totalorder %s100, %s102
      %p106 = scmp.eq.s32.totalorder %s24, 0
      %p107 = por %p105, %p106
      %p108 = scmp.ne.s32.totalorder %s100, %s102
      %p109 = scmp.eq.s32.totalorder %s29, 1
      %p110 = por %p108, %p109
      %p111 = scmp.ne.s32.totalorder %s102, %s103
      %p112 = scmp.eq.s32.totalorder %s29, 0
      %p113 = por %p111, %p112
      %p114 = scmp.ne.s32.totalorder %s102, %s103
      %p115 = scmp.eq.s32.totalorder %s30, 1
      %p116 = por %p114, %p115
      %p118 = scmp.ne.s32.totalorder %s103, %s117
      %p119 = scmp.eq.s32.totalorder %s30, 0
      %p120 = por %p118, %p119
      %s122 = sadd.s32 %s121, 1
      %p125 = scmp.eq.s32.totalorder %s24, 1
      %p126 = scmp.ne.s32.totalorder %s121, %s123
      %p127 = scmp.eq.s32.totalorder %s24, 0
      %p128 = por %p126, %p127
      %p129 = scmp.ne.s32.totalorder %s121, %s123
      %p130 = scmp.eq.s32.totalorder %s29, 1
      %p131 = por %p129, %p130
      %p132 = scmp.ne.s32.totalorder %s123, %s124
      %p133 = scmp.eq.s32.totalorder %s29, 0
      %p134 = por %p132, %p133
      %p135 = scmp.ne.s32.totalorder %s123, %s124
      %p136 = scmp.eq.s32.totalorder %s30, 1
      %p137 = por %p135, %p136
      %p139 = scmp.ne.s32.totalorder %s124, %s138
      %p140 = scmp.eq.s32.totalorder %s30, 0
      %p141 = por %p139, %p140
      %s143 = sadd.s32 %s142, 1
      %p146 = scmp.eq.s32.totalorder %s24, 1
      %p147 = scmp.ne.s32.totalorder %s142, %s144
      %p148 = scmp.eq.s32.totalorder %s24, 0
      %p149 = por %p147, %p148
      %p150 = scmp.ne.s32.totalorder %s142, %s144
      %p151 = scmp.eq.s32.totalorder %s29, 1
      %p152 = por %p150, %p151
      %p153 = scmp.ne.s32.totalorder %s144, %s145
      %p154 = scmp.eq.s32.totalorder %s29, 0
      %p155 = por %p153, %p154
      %p156 = scmp.ne.s32.totalorder %s144, %s145
      %p157 = scmp.eq.s32.totalorder %s30, 1
      %p158 = por %p156, %p157
      %p160 = scmp.ne.s32.totalorder %s145, %s159
      %p161 = scmp.eq.s32.totalorder %s30, 0
      %p162 = por %p160, %p161
      %s164 = sadd.s32 %s163, 1
      %p167 = scmp.eq.s32.totalorder %s24, 1
      %p168 = scmp.ne.s32.totalorder %s163, %s165
      %p169 = scmp.eq.s32.totalorder %s24, 0
      %p170 = por %p168, %p169
      %p171 = scmp.ne.s32.totalorder %s163, %s165
      %p172 = scmp.eq.s32.totalorder %s29, 1
      %p173 = por %p171, %p172
      %p174 = scmp.ne.s32.totalorder %s165, %s166
      %p175 = scmp.eq.s32.totalorder %s29, 0
      %p176 = por %p174, %p175
      %p177 = scmp.ne.s32.totalorder %s165, %s166
      %p178 = scmp.eq.s32.totalorder %s30, 1
      %p179 = por %p177, %p178
      %p181 = scmp.ne.s32.totalorder %s166, %s180
      %p182 = scmp.eq.s32.totalorder %s30, 0
      %p183 = por %p181, %p182
      %s185 = sadd.s32 %s184, 1
      %p188 = scmp.eq.s32.totalorder %s24, 1
      %p189 = scmp.ne.s32.totalorder %s184, %s186
      %p190 = scmp.eq.s32.totalorder %s24, 0
      %p191 = por %p189, %p190
      %p192 = scmp.ne.s32.totalorder %s184, %s186
      %p193 = scmp.eq.s32.totalorder %s29, 1
      %p194 = por %p192, %p193
      %p195 = scmp.ne.s32.totalorder %s186, %s187
      %p196 = scmp.eq.s32.totalorder %s29, 0
      %p197 = por %p195, %p196
      %p198 = scmp.ne.s32.totalorder %s186, %s187
      %p199 = scmp.eq.s32.totalorder %s30, 1
      %p200 = por %p198, %p199
      %p202 = scmp.ne.s32.totalorder %s187, %s201
      %p203 = scmp.eq.s32.totalorder %s30, 0
      %p204 = por %p202, %p203
      %s206 = sadd.s32 %s205, 1
      %p209 = scmp.eq.s32.totalorder %s24, 1
      %p210 = scmp.ne.s32.totalorder %s205, %s207
      %p211 = scmp.eq.s32.totalorder %s24, 0
      %p212 = por %p210, %p211
      %p213 = scmp.ne.s32.totalorder %s205, %s207
      %p214 = scmp.eq.s32.totalorder %s29, 1
      %p215 = por %p213, %p214
      %p216 = scmp.ne.s32.totalorder %s207, %s208
      %p217 = scmp.eq.s32.totalorder %s29, 0
      %p218 = por %p216, %p217
      %p219 = scmp.ne.s32.totalorder %s207, %s208
      %p220 = scmp.eq.s32.totalorder %s30, 1
      %p221 = por %p219, %p220
      %p223 = scmp.ne.s32.totalorder %s208, %s222
      %p224 = scmp.eq.s32.totalorder %s30, 0
      %p225 = por %p223, %p224
      %s227 = sadd.s32 %s226, 1
      %p230 = scmp.eq.s32.totalorder %s24, 1
      %p231 = scmp.ne.s32.totalorder %s226, %s228
      %p232 = scmp.eq.s32.totalorder %s24, 0
      %p233 = por %p231, %p232
      %p234 = scmp.ne.s32.totalorder %s226, %s228
      %p235 = scmp.eq.s32.totalorder %s29, 1
      %p236 = por %p234, %p235
      %p237 = scmp.ne.s32.totalorder %s228, %s229
      %p238 = scmp.eq.s32.totalorder %s29, 0
      %p239 = por %p237, %p238
      %p240 = scmp.ne.s32.totalorder %s228, %s229
      %p241 = scmp.eq.s32.totalorder %s30, 1
      %p242 = por %p240, %p241
      %p244 = scmp.ne.s32.totalorder %s229, %s243
      %p245 = scmp.eq.s32.totalorder %s30, 0
      %p246 = por %p244, %p245
      %s248 = sadd.s32 %s247, 1
      %p251 = scmp.eq.s32.totalorder %s24, 1
      %p252 = scmp.ne.s32.totalorder %s247, %s249
      %p253 = scmp.eq.s32.totalorder %s24, 0
      %p254 = por %p252, %p253
      %p255 = scmp.ne.s32.totalorder %s247, %s249
      %p256 = scmp.eq.s32.totalorder %s29, 1
      %p257 = por %p255, %p256
      %p258 = scmp.ne.s32.totalorder %s249, %s250
      %p259 = scmp.eq.s32.totalorder %s29, 0
      %p260 = por %p258, %p259
      %p261 = scmp.ne.s32.totalorder %s249, %s250
      %p262 = scmp.eq.s32.totalorder %s30, 1
      %p263 = por %p261, %p262
      %p265 = scmp.ne.s32.totalorder %s250, %s264
      %p266 = scmp.eq.s32.totalorder %s30, 0
      %p267 = por %p265, %p266
      %s269 = sadd.s32 %s268, 1
      %p272 = scmp.eq.s32.totalorder %s24, 1
      %p273 = scmp.ne.s32.totalorder %s268, %s270
      %p274 = scmp.eq.s32.totalorder %s24, 0
      %p275 = por %p273, %p274
      %p276 = scmp.ne.s32.totalorder %s268, %s270
      %p277 = scmp.eq.s32.totalorder %s29, 1
      %p278 = por %p276, %p277
      %p279 = scmp.ne.s32.totalorder %s270, %s271
      %p280 = scmp.eq.s32.totalorder %s29, 0
      %p281 = por %p279, %p280
      %p282 = scmp.ne.s32.totalorder %s270, %s271
      %p283 = scmp.eq.s32.totalorder %s30, 1
      %p284 = por %p282, %p283
      %p286 = scmp.ne.s32.totalorder %s271, %s285
      %p287 = scmp.eq.s32.totalorder %s30, 0
      %p288 = por %p286, %p287
      %s290 = sadd.s32 %s289, 1
      %p293 = scmp.eq.s32.totalorder %s24, 1
      %p294 = scmp.ne.s32.totalorder %s289, %s291
      %p295 = scmp.eq.s32.totalorder %s24, 0
      %p296 = por %p294, %p295
      %p297 = scmp.ne.s32.totalorder %s289, %s291
      %p298 = scmp.eq.s32.totalorder %s29, 1
      %p299 = por %p297, %p298
      %p300 = scmp.ne.s32.totalorder %s291, %s292
      %p301 = scmp.eq.s32.totalorder %s29, 0
      %p302 = por %p300, %p301
      %p303 = scmp.ne.s32.totalorder %s291, %s292
      %p304 = scmp.eq.s32.totalorder %s30, 1
      %p305 = por %p303, %p304
      %p307 = scmp.ne.s32.totalorder %s292, %s306
      %p308 = scmp.eq.s32.totalorder %s30, 0
      %p309 = por %p307, %p308
      %s310 = ssub.s32 %s24, %s31
      %p311 = scmp.eq.s32.totalorder %s310, 0
      %s313 = sadd.s32 %s312, 1
      %s314 = scalar_select %p311, %s312, %s313
      %p317 = pneg %p311
      %p318 = scmp.eq.s32.totalorder %s24, 1
      %p319 = por %p317, %p318
      %p320 = scmp.ne.s32.totalorder %s312, %s315
      %p321 = scmp.eq.s32.totalorder %s24, 0
      %p322 = por %p320, %p321
      %p323 = scmp.ne.s32.totalorder %s312, %s315
      %p324 = scmp.eq.s32.totalorder %s29, 1
      %p325 = por %p323, %p324
      %p326 = scmp.ne.s32.totalorder %s315, %s316
      %p327 = scmp.eq.s32.totalorder %s29, 0
      %p328 = por %p326, %p327
      %p329 = scmp.ne.s32.totalorder %s315, %s316
      %p330 = scmp.eq.s32.totalorder %s30, 1
      %p331 = por %p329, %p330
      %p333 = scmp.ne.s32.totalorder %s316, %s332
      %p334 = scmp.eq.s32.totalorder %s30, 0
      %p335 = por %p333, %p334
      %s336 = ssub.s32 %s24, %s31
      %p337 = scmp.eq.s32.totalorder %s336, 0
      %s339 = sadd.s32 %s338, 1
      %s340 = scalar_select %p337, %s338, %s339
      %p343 = pneg %p337
      %p344 = scmp.eq.s32.totalorder %s24, 1
      %p345 = por %p343, %p344
      %p346 = scmp.ne.s32.totalorder %s338, %s341
      %p347 = scmp.eq.s32.totalorder %s24, 0
      %p348 = por %p346, %p347
      %p349 = scmp.ne.s32.totalorder %s338, %s341
      %p350 = scmp.eq.s32.totalorder %s29, 1
      %p351 = por %p349, %p350
      %p352 = scmp.ne.s32.totalorder %s341, %s342
      %p353 = scmp.eq.s32.totalorder %s29, 0
      %p354 = por %p352, %p353
      %p355 = scmp.ne.s32.totalorder %s341, %s342
      %p356 = scmp.eq.s32.totalorder %s30, 1
      %p357 = por %p355, %p356
      %p359 = scmp.ne.s32.totalorder %s342, %s358
      %p360 = scmp.eq.s32.totalorder %s30, 0
      %p361 = por %p359, %p360
      %p362 = scmp.le.s32.totalorder 1, %s24
      %p363 = scmp.lt.s32.totalorder %s24, 3
      %p364 = pnand %p362, %p363
      %p365 = pneg %p364
      // Predicated region
      $region9: #{clip_vision_forward.1} parent=5 // pred_check
        _
      $region10: #{clip_vision_forward.1} parent=5 // pred_check_branch
        %367 = sbr.rel (%p364) target = $region12
      $region11: #{clip_vision_forward.1} parent=5 // pred_region
        %s368 = ssub.s32 %s24, 1
        // Predicated region
        $region13: #{clip_vision_forward.1} parent=11 // pred_check
          %p369 = pneg %p71
        $region14: #{clip_vision_forward.1} parent=11 // pred_check_branch
          %371 = sbr.rel (%p369) target = $region16
        $region15: #{clip_vision_forward.1} parent=11 // pred_region
          _
        $region16: #{clip_vision_forward.1} parent=11 // pred_fallthru
          _
        // Predicated region
        $region17: #{clip_vision_forward.1} parent=11 // pred_check
          %p372 = pneg %p92
        $region18: #{clip_vision_forward.1} parent=11 // pred_check_branch
          %374 = sbr.rel (%p372) target = $region20
        $region19: #{clip_vision_forward.1} parent=11 // pred_region
          _
        $region20: #{clip_vision_forward.1} parent=11 // pred_fallthru
          _
        // Predicated region
        $region21: #{clip_vision_forward.1} parent=11 // pred_check
          %p375 = pneg %p113
        $region22: #{clip_vision_forward.1} parent=11 // pred_check_branch
          %377 = sbr.rel (%p375) target = $region24
        $region23: #{clip_vision_forward.1} parent=11 // pred_region
          _
        $region24: #{clip_vision_forward.1} parent=11 // pred_fallthru
          _
        // Predicated region
        $region25: #{clip_vision_forward.1} parent=11 // pred_check
          %p378 = pneg %p134
        $region26: #{clip_vision_forward.1} parent=11 // pred_check_branch
          %380 = sbr.rel (%p378) target = $region28
        $region27: #{clip_vision_forward.1} parent=11 // pred_region
          _
        $region28: #{clip_vision_forward.1} parent=11 // pred_fallthru
          _
        // Predicated region
        $region29: #{clip_vision_forward.1} parent=11 // pred_check
          %p381 = pneg %p155
        $region30: #{clip_vision_forward.1} parent=11 // pred_check_branch
          %383 = sbr.rel (%p381) target = $region32
        $region31: #{clip_vision_forward.1} parent=11 // pred_region
          _
        $region32: #{clip_vision_forward.1} parent=11 // pred_fallthru
          _
        // Predicated region
        $region33: #{clip_vision_forward.1} parent=11 // pred_check
          %p384 = pneg %p176
        $region34: #{clip_vision_forward.1} parent=11 // pred_check_branch
          %386 = sbr.rel (%p384) target = $region36
        $region35: #{clip_vision_forward.1} parent=11 // pred_region
          _
        $region36: #{clip_vision_forward.1} parent=11 // pred_fallthru
          _
        // Predicated region
        $region37: #{clip_vision_forward.1} parent=11 // pred_check
          %p387 = pneg %p197
        $region38: #{clip_vision_forward.1} parent=11 // pred_check_branch
          %389 = sbr.rel (%p387) target = $region40
        $region39: #{clip_vision_forward.1} parent=11 // pred_region
          _
        $region40: #{clip_vision_forward.1} parent=11 // pred_fallthru
          _
        // Predicated region
        $region41: #{clip_vision_forward.1} parent=11 // pred_check
          %p390 = pneg %p218
        $region42: #{clip_vision_forward.1} parent=11 // pred_check_branch
          %392 = sbr.rel (%p390) target = $region44
        $region43: #{clip_vision_forward.1} parent=11 // pred_region
          _
        $region44: #{clip_vision_forward.1} parent=11 // pred_fallthru
          _
        // Predicated region
        $region45: #{clip_vision_forward.1} parent=11 // pred_check
          %p393 = pneg %p239
        $region46: #{clip_vision_forward.1} parent=11 // pred_check_branch
          %395 = sbr.rel (%p393) target = $region48
        $region47: #{clip_vision_forward.1} parent=11 // pred_region
          _
        $region48: #{clip_vision_forward.1} parent=11 // pred_fallthru
          _
        // Predicated region
        $region49: #{clip_vision_forward.1} parent=11 // pred_check
          %p396 = pneg %p260
        $region50: #{clip_vision_forward.1} parent=11 // pred_check_branch
          %398 = sbr.rel (%p396) target = $region52
        $region51: #{clip_vision_forward.1} parent=11 // pred_region
          _
        $region52: #{clip_vision_forward.1} parent=11 // pred_fallthru
          _
        // Predicated region
        $region53: #{clip_vision_forward.1} parent=11 // pred_check
          %p399 = pneg %p281
        $region54: #{clip_vision_forward.1} parent=11 // pred_check_branch
          %401 = sbr.rel (%p399) target = $region56
        $region55: #{clip_vision_forward.1} parent=11 // pred_region
          _
        $region56: #{clip_vision_forward.1} parent=11 // pred_fallthru
          _
        // Predicated region
        $region57: #{clip_vision_forward.1} parent=11 // pred_check
          %p402 = pneg %p302
        $region58: #{clip_vision_forward.1} parent=11 // pred_check_branch
          %404 = sbr.rel (%p402) target = $region60
        $region59: #{clip_vision_forward.1} parent=11 // pred_region
          _
        $region60: #{clip_vision_forward.1} parent=11 // pred_fallthru
          _
      $region12: #{clip_vision_forward.1} parent=5 // pred_fallthru
        _
      %p405 = scmp.lt.s32.totalorder %s24, 2
      // Predicated region
      $region61: #{clip_vision_forward.1} parent=5 // pred_check
        %p406 = pneg %p405
      $region62: #{clip_vision_forward.1} parent=5 // pred_check_branch
        %408 = sbr.rel (%p406) target = $region64
      $region63: #{clip_vision_forward.1} parent=5 // pred_region
        // Predicated region
        $region65: #{clip_vision_forward.1} parent=63 // pred_check
          %p409 = pneg %p44
        $region66: #{clip_vision_forward.1} parent=63 // pred_check_branch
          %411 = sbr.rel (%p409) target = $region68
        $region67: #{clip_vision_forward.1} parent=63 // pred_region
          %p412 = scmp.lt.s32.totalorder %s24, 1
          %s413 = scalar_select %p412, %s24, 1
          %s414 = smul.addr %s413, 2
          %s415 = smul.addr %s414, 8
          %s416 = scalar_lea.vmem %s0, %s415
        $region68: #{clip_vision_forward.1} parent=63 // pred_fallthru
          _
      $region64: #{clip_vision_forward.1} parent=5 // pred_fallthru
        _
      %p417 = scmp.le.s32.totalorder 1, %s24
      %p418 = scmp.lt.s32.totalorder %s24, 3
      %p419 = pnand %p417, %p418
      %p420 = pneg %p419
      // Predicated region
      $region69: #{clip_vision_forward.1} parent=5 // pred_check
        _
      $region70: #{clip_vision_forward.1} parent=5 // pred_check_branch
        %422 = sbr.rel (%p419) target = $region72
      $region71: #{clip_vision_forward.1} parent=5 // pred_region
        %s423 = ssub.s32 %s24, 1
        %p424 = scmp.lt.s32.totalorder %s29, 1
        %s425 = scalar_select %p424, %s29, 1
        %s426 = smul.addr %s425, 2
        %s427 = smul.addr %s426, 8
        %s428 = scalar_lea.vmem %s0, %s427
        %p429 = pneg %p50
        %p430 = pneg %p47
        %p431 = pneg %p71
        %p432 = pneg %p68
        %p433 = pneg %p92
        %p434 = pneg %p89
        %p435 = pneg %p113
        %p436 = pneg %p110
        %p437 = pneg %p134
        %p438 = pneg %p131
        %p439 = pneg %p155
        %p440 = pneg %p152
        %p441 = pneg %p176
        %p442 = pneg %p173
        %p443 = pneg %p197
        %p444 = pneg %p194
        %p445 = pneg %p218
        %p446 = pneg %p215
        %p447 = pneg %p239
        %p448 = pneg %p236
        %p449 = pneg %p260
        %p450 = pneg %p257
        %p451 = pneg %p281
        %p452 = pneg %p278
        %p453 = pneg %p302
        %p454 = pneg %p299
        %p455 = pneg %p328
        %p456 = pneg %p325
        %p457 = scmp.lt.s32.totalorder %s29, 1
        %s458 = scalar_select %p457, %s29, 1
        %s459 = smul.addr %s458, 8
        %s460 = scalar_lea.vmem %s13, %s459
        %p461 = pneg %p354
        %p462 = pneg %p351
        %s463 = sand.u32 %s341, 1
        %s464 = scalar_lea.sflag [#allocation3], %s463
        %s465 = sand.u32 %s341, 1
        %s466 = scalar_lea.vmem [#allocation2], %s465
        %p467 = scmp.lt.s32.totalorder %s29, 1
        %s468 = scalar_select %p467, %s29, 1
        %s469 = smul.addr %s468, 2
        %s470 = smul.addr %s469, 8
        %s471 = scalar_lea.vmem %s0, %s470
        %p472 = scmp.lt.s32.totalorder %s29, 1
        %s473 = scalar_select %p472, %s29, 1
        %s474 = smul.addr %s473, 8
        %s475 = scalar_lea.vmem %s13, %s474
        %v477 = vld [vmem:[%s471] sm:$0x1f]
        %v478 = vld [vmem:[%s471 + $0x8] sm:$0x1f]
        %v479 = vld [vmem:[%s2] sm:$0xf]
        %v480 = vld [vmem:[%s2 + $0x4] sm:$0xf]
        %v481 = vld [vmem:[%s2 + $0x8] sm:$0xf]
        %v482 = vld [vmem:[%s2 + $0xc] sm:$0xf]
        %v483 = vld [vmem:[%s2 + $0x10] sm:$0xf]
        %v484 = vld [vmem:[%s2 + $0x14] sm:$0xf]
        %v485 = vld [vmem:[%s2 + $0x18] sm:$0xf]
        %v486 = vld [vmem:[%s2 + $0x1c] sm:$0xf]
        %v487 = vld [vmem:[%s2 + $0x20] sm:$0xf]
        %v488 = vld [vmem:[%s2 + $0x24] sm:$0xf]
        %v489 = vld [vmem:[%s2 + $0x28] sm:$0xf]
        %v490 = vld [vmem:[%s2 + $0x2c] sm:$0xf]
        %v491 = vld [vmem:[%s2 + $0x30] sm:$0xf]
        %v492 = vld [vmem:[%s2 + $0x34] sm:$0xf]
        %v493 = vld [vmem:[%s2 + $0x38] sm:$0xf]
        %v494 = vld [vmem:[%s2 + $0x3c] sm:$0xf]
        %v495 = vld [vmem:[%s2 + $0x40] sm:$0xf]
        %v496 = vld [vmem:[%s2 + $0x44] sm:$0xf]
        %v497 = vld [vmem:[%s2 + $0x48] sm:$0xf]
        %v498 = vld [vmem:[%s2 + $0x4c] sm:$0xf]
        %v499 = vld [vmem:[%s2 + $0x50] sm:$0xf]
        %v500 = vld [vmem:[%s2 + $0x54] sm:$0xf]
        %v501 = vld [vmem:[%s2 + $0x58] sm:$0xf]
        %v502 = vld [vmem:[%s2 + $0x5c] sm:$0xf]
        %v503 = vpack.c.bf16 %v477, %v477
        %v504 = vpack.c.bf16 %v478, %v478
        %v505 = vld [vmem:[%s1] sm:$0x1f]
        %v530 = vunpack.c.l.b16 %v479
        %v531 = vunpack.c.l.b16 %v480
        %v532 = vunpack.c.l.b16 %v481
        %v533 = vunpack.c.l.b16 %v482
        %v534 = vunpack.c.l.b16 %v483
        %v535 = vunpack.c.l.b16 %v484
        %v536 = vunpack.c.l.b16 %v485
        %v537 = vunpack.c.l.b16 %v486
        %v538 = vunpack.c.l.b16 %v487
        %v539 = vunpack.c.l.b16 %v488
        %v540 = vunpack.c.l.b16 %v489
        %v541 = vunpack.c.l.b16 %v490
        %v542 = vunpack.c.l.b16 %v491
        %v543 = vunpack.c.l.b16 %v492
        %v544 = vunpack.c.l.b16 %v493
        %v545 = vunpack.c.l.b16 %v494
        %v546 = vunpack.c.l.b16 %v495
        %v547 = vunpack.c.l.b16 %v496
        %v548 = vunpack.c.l.b16 %v497
        %v549 = vunpack.c.l.b16 %v498
        %v550 = vunpack.c.l.b16 %v499
        %v551 = vunpack.c.l.b16 %v500
        %v552 = vunpack.c.l.b16 %v501
        %v553 = vunpack.c.l.b16 %v502
        %v554 = vpack.c.b16 %v531, %v530
        %v555 = vpack.c.b16 %v533, %v532
        %v556 = vpack.c.b16 %v535, %v534
        %v557 = vpack.c.b16 %v537, %v536
        %v558 = vpack.c.b16 %v539, %v538
        %v559 = vpack.c.b16 %v541, %v540
        %v560 = vpack.c.b16 %v543, %v542
        %v561 = vpack.c.b16 %v545, %v544
        %v562 = vpack.c.b16 %v547, %v546
        %v563 = vpack.c.b16 %v549, %v548
        %v564 = vpack.c.b16 %v551, %v550
        %v565 = vpack.c.b16 %v553, %v552
        %vm578 = vcmask 523264
        %v580 = vsel %vm578, %v504, 0
        %582 = vmatprep.subr.bf16.mxu0 0
        %583 = vmatpush1.bf16.msra.mxu0 %v554
        %584 = vmatprep.subr.bf16.mxu0 0
        %585 = vmatpush1.bf16.msra.mxu0 %v555
        %586 = vmatprep.subr.bf16.mxu0 0
        %587 = vmatpush1.bf16.msra.mxu0 %v556
        %588 = vmatprep.subr.bf16.mxu0 0
        %589 = vmatpush1.bf16.msra.mxu0 %v557
        %590 = vmatprep.subr.bf16.mxu0 0
        %591 = vmatpush1.bf16.msra.mxu0 %v558
        %592 = vmatprep.subr.bf16.mxu0 0
        %593 = vmatpush1.bf16.msra.mxu0 %v559
        %594 = vmatprep.subr.bf16.mxu0 0
        %595 = vmatpush1.bf16.msra.mxu0 %v560
        %596 = vmatprep.subr.bf16.mxu0 0
        %597 = vmatpush1.bf16.msra.mxu0 %v561
        %598 = vmatprep.subr.bf16.mxu0 0
        %599 = vmatpush1.bf16.msra.mxu0 %v562
        %600 = vmatprep.subr.bf16.mxu0 0
        %601 = vmatpush1.bf16.msra.mxu0 %v563
        %602 = vmatprep.subr.bf16.mxu0 0
        %603 = vmatpush1.bf16.msra.mxu0 %v564
        %604 = vmatprep.subr.bf16.mxu0 0
        %605 = vmatpush1.bf16.msra.mxu0 %v565
        %606 = vmatprep.subr.bf16.mxu0 0
        %607 = vmatpush1.bf16.msra.mxu0 0
        %608 = vmatprep.subr.bf16.mxu0 0
        %609 = vmatpush1.bf16.msra.mxu0 0
        %610 = vmatprep.subr.bf16.mxu0 0
        %611 = vmatpush1.bf16.msra.mxu0 0
        %612 = vmatprep.subr.bf16.mxu0 0
        %613 = vmatpush1.bf16.msra.mxu0 0
        %614 = vmatprep.mubr.bf16.mxu0 %v580
        %615 = vmatmul.mubr.bf16.gmra.mrb[0].mxu0 %v503
        %v616 = vpop.f32.mrb[0].mxu0
        %v617 = vadd.f32 %v505, %v616
        %v618 = vpop.f32.mrb[0].mxu0
        %v619 = vpop.f32.mrb[0].mxu0
        %v620 = vpop.f32.mrb[0].mxu0
        %621 = vdwg.mxu0
        %v622 = vld [vmem:[%s3] sm:$0xf]
        %vm623 = vcmask 520192
        %v624 = vsel %vm623, %v617, 0.0
        %625 = vadd.xlane.f32.xlu0 %v624
        %v626 = vpop.xlane.xlu0 %625
        %v627 = vrcp.pop 64.0
        %v628 = vmul.f32 %v626, %v627
        %v629 = vsub.f32 %v617, %v628
        %v630 = vmul.f32 %v629, %v629
        %v631 = vsel %vm623, %v630, 0.0
        %632 = vadd.xlane.f32.xlu0 %v631
        %v633 = vpop.xlane.xlu0 %632
        %v634 = vmul.f32 %v633, %v627
        %v635 = vadd.f32 %v634, 1e-05
        %v636 = vrsqrt.pop %v635
        %v637 = vmul.f32 %v629, %v636
        %v638 = vlaneseq
        %v639 = vshrl.u32 %v638, 7
        %v640 = vsub.s32 0, %v639
        %v641 = vrot.slane %v622, %v640
        %v642 = vmul.f32 %v637, %v641
        %v643 = vlaneseq
        %v644 = vshrl.u32 %v643, 7
        %v645 = vsub.s32 1, %v644
        %v646 = vrot.slane %v622, %v645
        %v647 = vadd.f32 %v642, %v646
        %v648 = vld [vmem:[%s4] sm:$0xf]
        %v649 = vsel %vm623, %v647, 0.0
        %650 = vadd.xlane.f32.xlu0 %v649
        %v651 = vpop.xlane.xlu0 %650
        %v652 = vmul.f32 %v651, %v627
        %v653 = vsub.f32 %v647, %v652
        %v654 = vmul.f32 %v653, %v653
        %v655 = vsel %vm623, %v654, 0.0
        %656 = vadd.xlane.f32.xlu0 %v655
        %v657 = vpop.xlane.xlu0 %656
        %v658 = vmul.f32 %v657, %v627
        %v659 = vadd.f32 %v658, 1e-05
        %v660 = vrsqrt.pop %v659
        %v661 = vmul.f32 %v653, %v660
        %v662 = vlaneseq
        %v663 = vshrl.u32 %v662, 7
        %v664 = vsub.s32 0, %v663
        %v665 = vrot.slane %v648, %v664
        %v666 = vmul.f32 %v661, %v665
        %v667 = vlaneseq
        %v668 = vshrl.u32 %v667, 7
        %v669 = vsub.s32 1, %v668
        %v670 = vrot.slane %v648, %v669
        %v671 = vadd.f32 %v666, %v670
        %v672 = vld [vmem:[%s5] sm:$0xff]
        %v673 = vld [vmem:[%s5 + $0x8] sm:$0xff]
        %v674 = vld [vmem:[%s5 + $0x10] sm:$0xff]
        %v675 = vld [vmem:[%s5 + $0x18] sm:$0xff]
        %v676 = vld [vmem:[%s5 + $0x20] sm:$0xff]
        %v677 = vld [vmem:[%s5 + $0x28] sm:$0xff]
        %v678 = vld [vmem:[%s5 + $0x30] sm:$0xff]
        %v679 = vld [vmem:[%s5 + $0x38] sm:$0xff]
        %v680 = vld [vmem:[%s6] sm:$0x3]
        %v681 = vpack.c.bf16 %v671, %v671
        %v683 = vlaneseq
        %v684 = vshrl.u32 %v683, 7
        %v685 = vsub.s32 0, %v684
        %v686 = vrot.slane %v680, %v685
        %v687 = vlaneseq
        %v688 = vshrl.u32 %v687, 7
        %v689 = vsub.s32 1, %v688
        %v690 = vrot.slane %v680, %v689
        %v701 = vunpack.c.l.b16 %v672
        %v702 = vunpack.c.h.b16 %v672
        %v703 = vunpack.c.l.b16 %v673
        %v704 = vunpack.c.h.b16 %v673
        %v705 = vunpack.c.l.b16 %v674
        %v706 = vunpack.c.h.b16 %v674
        %v707 = vunpack.c.l.b16 %v675
        %v708 = vunpack.c.h.b16 %v675
        %v709 = vunpack.c.l.b16 %v676
        %v710 = vunpack.c.h.b16 %v676
        %v711 = vunpack.c.l.b16 %v677
        %v712 = vunpack.c.h.b16 %v677
        %v713 = vunpack.c.l.b16 %v678
        %v714 = vunpack.c.h.b16 %v678
        %v715 = vunpack.c.l.b16 %v679
        %v716 = vunpack.c.h.b16 %v679
        %v717 = vpack.c.b16 %v703, %v701
        %v718 = vpack.c.b16 %v704, %v702
        %v719 = vpack.c.b16 %v707, %v705
        %v720 = vpack.c.b16 %v708, %v706
        %v721 = vpack.c.b16 %v711, %v709
        %v722 = vpack.c.b16 %v712, %v710
        %v723 = vpack.c.b16 %v715, %v713
        %v724 = vpack.c.b16 %v716, %v714
        %v734 = vsel %vm578, %v681, 0
        %736 = vmatprep.subr.bf16.mxu0 %v718
        %737 = vmatpush1.bf16.msra.mxu0 %v717
        %738 = vmatprep.subr.bf16.mxu0 %v720
        %739 = vmatpush1.bf16.msra.mxu0 %v719
        %740 = vmatprep.subr.bf16.mxu0 %v722
        %741 = vmatpush1.bf16.msra.mxu0 %v721
        %742 = vmatprep.subr.bf16.mxu0 %v724
        %743 = vmatpush1.bf16.msra.mxu0 %v723
        %744 = vmatprep.subr.bf16.mxu0 0
        %745 = vmatpush1.bf16.msra.mxu0 0
        %746 = vmatprep.subr.bf16.mxu0 0
        %747 = vmatpush1.bf16.msra.mxu0 0
        %748 = vmatprep.subr.bf16.mxu0 0
        %749 = vmatpush1.bf16.msra.mxu0 0
        %750 = vmatprep.subr.bf16.mxu0 0
        %751 = vmatpush1.bf16.msra.mxu0 0
        %752 = vmatprep.subr.bf16.mxu0 0
        %753 = vmatpush1.bf16.msra.mxu0 0
        %754 = vmatprep.subr.bf16.mxu0 0
        %755 = vmatpush1.bf16.msra.mxu0 0
        %756 = vmatprep.subr.bf16.mxu0 0
        %757 = vmatpush1.bf16.msra.mxu0 0
        %758 = vmatprep.subr.bf16.mxu0 0
        %759 = vmatpush1.bf16.msra.mxu0 0
        %760 = vmatprep.subr.bf16.mxu0 0
        %761 = vmatpush1.bf16.msra.mxu0 0
        %762 = vmatprep.subr.bf16.mxu0 0
        %763 = vmatpush1.bf16.msra.mxu0 0
        %764 = vmatprep.subr.bf16.mxu0 0
        %765 = vmatpush1.bf16.msra.mxu0 0
        %766 = vmatprep.subr.bf16.mxu0 0
        %767 = vmatpush1.bf16.msra.mxu0 0
        %768 = vmatprep.mubr.bf16.mxu0 0
        %769 = vmatmul.mubr.bf16.gmra.mrb[0].mxu0 %v734
        %v770 = vpop.f32.mrb[0].mxu0
        %v771 = vadd.f32 %v686, %v770
        %v772 = vpop.f32.mrb[0].mxu0
        %v773 = vadd.f32 %v690, %v772
        %v774 = vpop.f32.mrb[0].mxu0
        %v775 = vpop.f32.mrb[0].mxu0
        %776 = vdwg.mxu0
        %778 = vrot.lane.b32.xlu0 %v771, 64
        %v779 = vpop.permute.xlu0 %778
        %vm780 = vcmask 261120
        %v781 = vsel %vm780, %v771, 0
        %v783 = vsel %vm780, %v779, 0
        %785 = vmatprep.subr.mxu0 0.0
        %786 = vmatpush1.xpose.msra.mxu0 %v783
        %787 = vmatprep.subr.mxu0 0.0
        %788 = vmatpush1.xpose.msra.mxu0 0.0
        %789 = vmatprep.subr.mxu0 0.0
        %790 = vmatpush1.xpose.msra.mxu0 0.0
        %791 = vmatprep.subr.mxu0 0.0
        %792 = vmatpush1.xpose.msra.mxu0 0.0
        %793 = vmatprep.subr.mxu0 0.0
        %794 = vmatpush1.xpose.msra.mxu0 0.0
        %795 = vmatprep.subr.mxu0 0.0
        %796 = vmatpush1.xpose.msra.mxu0 0.0
        %797 = vmatprep.subr.mxu0 0.0
        %798 = vmatpush1.xpose.msra.mxu0 0.0
        %799 = vmatprep.subr.mxu0 0.0
        %800 = vmatpush1.xpose.msra.mxu0 0.0
        %801 = vmatprep.subr.mxu0 0.0
        %802 = vmatpush1.xpose.msra.mxu0 0.0
        %803 = vmatprep.subr.mxu0 0.0
        %804 = vmatpush1.xpose.msra.mxu0 0.0
        %805 = vmatprep.subr.mxu0 0.0
        %806 = vmatpush1.xpose.msra.mxu0 0.0
        %807 = vmatprep.subr.mxu0 0.0
        %808 = vmatpush1.xpose.msra.mxu0 0.0
        %809 = vmatprep.subr.mxu0 0.0
        %810 = vmatpush1.xpose.msra.mxu0 0.0
        %811 = vmatprep.subr.mxu0 0.0
        %812 = vmatpush1.xpose.msra.mxu0 0.0
        %813 = vmatprep.subr.mxu0 0.0
        %814 = vmatpush1.xpose.msra.mxu0 0.0
        %815 = vmatprep.subr.mxu0 0.0
        %816 = vmatpush1.xpose.msra.mxu0 0.0
        %817 = vmatprep.subr.mxu0 0.0
        %818 = vmatpush1.xpose.msra.mxu0 0.0
        %819 = vmatprep.subr.mxu0 0.0
        %820 = vmatpush1.xpose.msra.mxu0 0.0
        %821 = vmatprep.subr.mxu0 0.0
        %822 = vmatpush1.xpose.msra.mxu0 0.0
        %823 = vmatprep.subr.mxu0 0.0
        %824 = vmatpush1.xpose.msra.mxu0 0.0
        %825 = vmatprep.subr.mxu0 0.0
        %826 = vmatpush1.xpose.msra.mxu0 0.0
        %827 = vmatprep.subr.mxu0 0.0
        %828 = vmatpush1.xpose.msra.mxu0 0.0
        %829 = vmatprep.subr.mxu0 0.0
        %830 = vmatpush1.xpose.msra.mxu0 0.0
        %831 = vmatprep.subr.mxu0 0.0
        %832 = vmatpush1.xpose.msra.mxu0 0.0
        %833 = vmatprep.subr.mxu0 0.0
        %834 = vmatpush1.xpose.msra.mxu0 0.0
        %835 = vmatprep.subr.mxu0 0.0
        %836 = vmatpush1.xpose.msra.mxu0 0.0
        %837 = vmatprep.subr.mxu0 0.0
        %838 = vmatpush1.xpose.msra.mxu0 0.0
        %839 = vmatprep.subr.mxu0 0.0
        %840 = vmatpush1.xpose.msra.mxu0 0.0
        %841 = vmatprep.subr.mxu0 0.0
        %842 = vmatpush1.xpose.msra.mxu0 0.0
        %843 = vmatprep.subr.mxu0 0.0
        %844 = vmatpush1.xpose.msra.mxu0 0.0
        %845 = vmatprep.subr.mxu0 0.0
        %846 = vmatpush1.xpose.msra.mxu0 0.0
        %847 = vmatprep.subr.mxu0 0.0
        %848 = vmatpush1.xpose.msra.mxu0 0.0
        %849 = vmatprep.mubr.f32.mxu0 0.0
        %850 = vmatmul.mubr.f32.gmra.mrb[0].mxu0 %v781
        %v851 = vpop.f32.mrb[0].mxu0
        %v852 = vadd.f32 0.0, %v851
        %v853 = vpop.f32.mrb[0].mxu0
        %854 = vdwg.mxu0
        %vm855 = vcmask 36864
        %v856 = vsel %vm855, %v852, -inf
        %857 = vmax.xlane.f32.xlu0 %v856
        %v858 = vpop.xlane.xlu0 %857
        %v859 = vsub.f32 %v852, %v858
        %v860 = vmul.f32 %v859, 1.442695
        %v861 = vpow.pop %v860
        %v862 = vsel %vm855, %v861, 0.0
        %863 = vadd.xlane.f32.xlu0 %v862
        %v864 = vpop.xlane.xlu0 %863
        %v865 = vrcp.pop %v864
        %v866 = vmul.f32 %v861, %v865
        %vm867 = vcmask 39936
        %v869 = vsel %vm867, %v866, 0
        %vm871 = vcmask 1044480
        %v873 = vsel %vm871, %v773, 0
        %875 = vmatprep.subr.mxu0 0.0
        %876 = vmatpush1.msra.mxu0 %v873
        %877 = vmatprep.subr.mxu0 0.0
        %878 = vmatpush1.msra.mxu0 0.0
        %879 = vmatprep.subr.mxu0 0.0
        %880 = vmatpush1.msra.mxu0 0.0
        %881 = vmatprep.subr.mxu0 0.0
        %882 = vmatpush1.msra.mxu0 0.0
        %883 = vmatprep.subr.mxu0 0.0
        %884 = vmatpush1.msra.mxu0 0.0
        %885 = vmatprep.subr.mxu0 0.0
        %886 = vmatpush1.msra.mxu0 0.0
        %887 = vmatprep.subr.mxu0 0.0
        %888 = vmatpush1.msra.mxu0 0.0
        %889 = vmatprep.subr.mxu0 0.0
        %890 = vmatpush1.msra.mxu0 0.0
        %891 = vmatprep.subr.mxu0 0.0
        %892 = vmatpush1.msra.mxu0 0.0
        %893 = vmatprep.subr.mxu0 0.0
        %894 = vmatpush1.msra.mxu0 0.0
        %895 = vmatprep.subr.mxu0 0.0
        %896 = vmatpush1.msra.mxu0 0.0
        %897 = vmatprep.subr.mxu0 0.0
        %898 = vmatpush1.msra.mxu0 0.0
        %899 = vmatprep.subr.mxu0 0.0
        %900 = vmatpush1.msra.mxu0 0.0
        %901 = vmatprep.subr.mxu0 0.0
        %902 = vmatpush1.msra.mxu0 0.0
        %903 = vmatprep.subr.mxu0 0.0
        %904 = vmatpush1.msra.mxu0 0.0
        %905 = vmatprep.subr.mxu0 0.0
        %906 = vmatpush1.msra.mxu0 0.0
        %907 = vmatprep.subr.mxu0 0.0
        %908 = vmatpush1.msra.mxu0 0.0
        %909 = vmatprep.subr.mxu0 0.0
        %910 = vmatpush1.msra.mxu0 0.0
        %911 = vmatprep.subr.mxu0 0.0
        %912 = vmatpush1.msra.mxu0 0.0
        %913 = vmatprep.subr.mxu0 0.0
        %914 = vmatpush1.msra.mxu0 0.0
        %915 = vmatprep.subr.mxu0 0.0
        %916 = vmatpush1.msra.mxu0 0.0
        %917 = vmatprep.subr.mxu0 0.0
        %918 = vmatpush1.msra.mxu0 0.0
        %919 = vmatprep.subr.mxu0 0.0
        %920 = vmatpush1.msra.mxu0 0.0
        %921 = vmatprep.subr.mxu0 0.0
        %922 = vmatpush1.msra.mxu0 0.0
        %923 = vmatprep.subr.mxu0 0.0
        %924 = vmatpush1.msra.mxu0 0.0
        %925 = vmatprep.subr.mxu0 0.0
        %926 = vmatpush1.msra.mxu0 0.0
        %927 = vmatprep.subr.mxu0 0.0
        %928 = vmatpush1.msra.mxu0 0.0
        %929 = vmatprep.subr.mxu0 0.0
        %930 = vmatpush1.msra.mxu0 0.0
        %931 = vmatprep.subr.mxu0 0.0
        %932 = vmatpush1.msra.mxu0 0.0
        %933 = vmatprep.subr.mxu0 0.0
        %934 = vmatpush1.msra.mxu0 0.0
        %935 = vmatprep.subr.mxu0 0.0
        %936 = vmatpush1.msra.mxu0 0.0
        %937 = vmatprep.subr.mxu0 0.0
        %938 = vmatpush1.msra.mxu0 0.0
        %939 = vmatprep.mubr.f32.mxu0 0.0
        %940 = vmatmul.mubr.f32.gmra.mrb[0].mxu0 %v869
        %v941 = vpop.f32.mrb[0].mxu0
        %v942 = vadd.f32 0.0, %v941
        %v943 = vpop.f32.mrb[0].mxu0
        %944 = vdwg.mxu0
        %945 = vrot.lane.b32.xlu0 %v771, 96
        %v946 = vpop.permute.xlu0 %945
        %947 = vrot.lane.b32.xlu0 %v771, 32
        %v948 = vpop.permute.xlu0 %947
        %v949 = vsel %vm780, %v946, 0
        %v951 = vsel %vm780, %v948, 0
        %953 = vmatprep.subr.mxu0 0.0
        %954 = vmatpush1.xpose.msra.mxu0 %v951
        %955 = vmatprep.subr.mxu0 0.0
        %956 = vmatpush1.xpose.msra.mxu0 0.0
        %957 = vmatprep.subr.mxu0 0.0
        %958 = vmatpush1.xpose.msra.mxu0 0.0
        %959 = vmatprep.subr.mxu0 0.0
        %960 = vmatpush1.xpose.msra.mxu0 0.0
        %961 = vmatprep.subr.mxu0 0.0
        %962 = vmatpush1.xpose.msra.mxu0 0.0
        %963 = vmatprep.subr.mxu0 0.0
        %964 = vmatpush1.xpose.msra.mxu0 0.0
        %965 = vmatprep.subr.mxu0 0.0
        %966 = vmatpush1.xpose.msra.mxu0 0.0
        %967 = vmatprep.subr.mxu0 0.0
        %968 = vmatpush1.xpose.msra.mxu0 0.0
        %969 = vmatprep.subr.mxu0 0.0
        %970 = vmatpush1.xpose.msra.mxu0 0.0
        %971 = vmatprep.subr.mxu0 0.0
        %972 = vmatpush1.xpose.msra.mxu0 0.0
        %973 = vmatprep.subr.mxu0 0.0
        %974 = vmatpush1.xpose.msra.mxu0 0.0
        %975 = vmatprep.subr.mxu0 0.0
        %976 = vmatpush1.xpose.msra.mxu0 0.0
        %977 = vmatprep.subr.mxu0 0.0
        %978 = vmatpush1.xpose.msra.mxu0 0.0
        %979 = vmatprep.subr.mxu0 0.0
        %980 = vmatpush1.xpose.msra.mxu0 0.0
        %981 = vmatprep.subr.mxu0 0.0
        %982 = vmatpush1.xpose.msra.mxu0 0.0
        %983 = vmatprep.subr.mxu0 0.0
        %984 = vmatpush1.xpose.msra.mxu0 0.0
        %985 = vmatprep.subr.mxu0 0.0
        %986 = vmatpush1.xpose.msra.mxu0 0.0
        %987 = vmatprep.subr.mxu0 0.0
        %988 = vmatpush1.xpose.msra.mxu0 0.0
        %989 = vmatprep.subr.mxu0 0.0
        %990 = vmatpush1.xpose.msra.mxu0 0.0
        %991 = vmatprep.subr.mxu0 0.0
        %992 = vmatpush1.xpose.msra.mxu0 0.0
        %993 = vmatprep.subr.mxu0 0.0
        %994 = vmatpush1.xpose.msra.mxu0 0.0
        %995 = vmatprep.subr.mxu0 0.0
        %996 = vmatpush1.xpose.msra.mxu0 0.0
        %997 = vmatprep.subr.mxu0 0.0
        %998 = vmatpush1.xpose.msra.mxu0 0.0
        %999 = vmatprep.subr.mxu0 0.0
        %1000 = vmatpush1.xpose.msra.mxu0 0.0
        %1001 = vmatprep.subr.mxu0 0.0
        %1002 = vmatpush1.xpose.msra.mxu0 0.0
        %1003 = vmatprep.subr.mxu0 0.0
        %1004 = vmatpush1.xpose.msra.mxu0 0.0
        %1005 = vmatprep.subr.mxu0 0.0
        %1006 = vmatpush1.xpose.msra.mxu0 0.0
        %1007 = vmatprep.subr.mxu0 0.0
        %1008 = vmatpush1.xpose.msra.mxu0 0.0
        %1009 = vmatprep.subr.mxu0 0.0
        %1010 = vmatpush1.xpose.msra.mxu0 0.0
        %1011 = vmatprep.subr.mxu0 0.0
        %1012 = vmatpush1.xpose.msra.mxu0 0.0
        %1013 = vmatprep.subr.mxu0 0.0
        %1014 = vmatpush1.xpose.msra.mxu0 0.0
        %1015 = vmatprep.subr.mxu0 0.0
        %1016 = vmatpush1.xpose.msra.mxu0 0.0
        %1017 = vmatprep.mubr.f32.mxu0 0.0
        %1018 = vmatmul.mubr.f32.gmra.mrb[0].mxu0 %v949
        %v1019 = vpop.f32.mrb[0].mxu0
        %v1020 = vadd.f32 0.0, %v1019
        %v1021 = vpop.f32.mrb[0].mxu0
        %1022 = vdwg.mxu0
        %v1023 = vsel %vm855, %v1020, -inf
        %1024 = vmax.xlane.f32.xlu0 %v1023
        %v1025 = vpop.xlane.xlu0 %1024
        %v1026 = vsub.f32 %v1020, %v1025
        %v1027 = vmul.f32 %v1026, 1.442695
        %v1028 = vpow.pop %v1027
        %v1029 = vsel %vm855, %v1028, 0.0
        %1030 = vadd.xlane.f32.xlu0 %v1029
        %v1031 = vpop.xlane.xlu0 %1030
        %v1032 = vrcp.pop %v1031
        %v1033 = vmul.f32 %v1028, %v1032
        %1034 = vrot.lane.b32.xlu0 %v773, 96
        %v1035 = vpop.permute.xlu0 %1034
        %v1037 = vsel %vm867, %v1033, 0
        %v1039 = vsel %vm871, %v1035, 0
        %1041 = vmatprep.subr.mxu0 0.0
        %1042 = vmatpush1.msra.mxu0 %v1039
        %1043 = vmatprep.subr.mxu0 0.0
        %1044 = vmatpush1.msra.mxu0 0.0
        %1045 = vmatprep.subr.mxu0 0.0
        %1046 = vmatpush1.msra.mxu0 0.0
        %1047 = vmatprep.subr.mxu0 0.0
        %1048 = vmatpush1.msra.mxu0 0.0
        %1049 = vmatprep.subr.mxu0 0.0
        %1050 = vmatpush1.msra.mxu0 0.0
        %1051 = vmatprep.subr.mxu0 0.0
        %1052 = vmatpush1.msra.mxu0 0.0
        %1053 = vmatprep.subr.mxu0 0.0
        %1054 = vmatpush1.msra.mxu0 0.0
        %1055 = vmatprep.subr.mxu0 0.0
        %1056 = vmatpush1.msra.mxu0 0.0
        %1057 = vmatprep.subr.mxu0 0.0
        %1058 = vmatpush1.msra.mxu0 0.0
        %1059 = vmatprep.subr.mxu0 0.0
        %1060 = vmatpush1.msra.mxu0 0.0
        %1061 = vmatprep.subr.mxu0 0.0
        %1062 = vmatpush1.msra.mxu0 0.0
        %1063 = vmatprep.subr.mxu0 0.0
        %1064 = vmatpush1.msra.mxu0 0.0
        %1065 = vmatprep.subr.mxu0 0.0
        %1066 = vmatpush1.msra.mxu0 0.0
        %1067 = vmatprep.subr.mxu0 0.0
        %1068 = vmatpush1.msra.mxu0 0.0
        %1069 = vmatprep.subr.mxu0 0.0
        %1070 = vmatpush1.msra.mxu0 0.0
        %1071 = vmatprep.subr.mxu0 0.0
        %1072 = vmatpush1.msra.mxu0 0.0
        %1073 = vmatprep.subr.mxu0 0.0
        %1074 = vmatpush1.msra.mxu0 0.0
        %1075 = vmatprep.subr.mxu0 0.0
        %1076 = vmatpush1.msra.mxu0 0.0
        %1077 = vmatprep.subr.mxu0 0.0
        %1078 = vmatpush1.msra.mxu0 0.0
        %1079 = vmatprep.subr.mxu0 0.0
        %1080 = vmatpush1.msra.mxu0 0.0
        %1081 = vmatprep.subr.mxu0 0.0
        %1082 = vmatpush1.msra.mxu0 0.0
        %1083 = vmatprep.subr.mxu0 0.0
        %1084 = vmatpush1.msra.mxu0 0.0
        %1085 = vmatprep.subr.mxu0 0.0
        %1086 = vmatpush1.msra.mxu0 0.0
        %1087 = vmatprep.subr.mxu0 0.0
        %1088 = vmatpush1.msra.mxu0 0.0
        %1089 = vmatprep.subr.mxu0 0.0
        %1090 = vmatpush1.msra.mxu0 0.0
        %1091 = vmatprep.subr.mxu0 0.0
        %1092 = vmatpush1.msra.mxu0 0.0
        %1093 = vmatprep.subr.mxu0 0.0
        %1094 = vmatpush1.msra.mxu0 0.0
        %1095 = vmatprep.subr.mxu0 0.0
        %1096 = vmatpush1.msra.mxu0 0.0
        %1097 = vmatprep.subr.mxu0 0.0
        %1098 = vmatpush1.msra.mxu0 0.0
        %1099 = vmatprep.subr.mxu0 0.0
        %1100 = vmatpush1.msra.mxu0 0.0
        %1101 = vmatprep.subr.mxu0 0.0
        %1102 = vmatpush1.msra.mxu0 0.0
        %1103 = vmatprep.subr.mxu0 0.0
        %1104 = vmatpush1.msra.mxu0 0.0
        %1105 = vmatprep.mubr.f32.mxu0 0.0
        %1106 = vmatmul.mubr.f32.gmra.mrb[0].mxu0 %v1037
        %v1107 = vpop.f32.mrb[0].mxu0
        %v1108 = vadd.f32 0.0, %v1107
        %v1109 = vpop.f32.mrb[0].mxu0
        %1110 = vdwg.mxu0
        %1112 = vrot.lane.b32.xlu0 %v1108, 32
        %v1113 = vpop.permute.xlu0 %1112
        %v1115 = vsel %vm780, %v942, %v1113
        %v1116 = vld [vmem:[%s7] sm:$0xf]
        %v1117 = vld [vmem:[%s7 + $0x4] sm:$0xf]
        %v1118 = vld [vmem:[%s7 + $0x8] sm:$0xf]
        %v1119 = vld [vmem:[%s7 + $0xc] sm:$0xf]
        %v1120 = vld [vmem:[%s7 + $0x10] sm:$0xf]
        %v1121 = vld [vmem:[%s7 + $0x14] sm:$0xf]
        %v1122 = vld [vmem:[%s7 + $0x18] sm:$0xf]
        %v1123 = vld [vmem:[%s7 + $0x1c] sm:$0xf]
        %v1124 = vld [vmem:[%s8] sm:$0x1]
        %v1125 = vpack.c.bf16 %v1115, %v1115
        %v1127 = vlaneseq
        %v1128 = vshrl.u32 %v1127, 7
        %v1129 = vsub.s32 0, %v1128
        %v1130 = vrot.slane %v1124, %v1129
        %v1140 = vunpack.c.l.b16 %v1116
        %v1141 = vunpack.c.l.b16 %v1117
        %v1142 = vunpack.c.l.b16 %v1118
        %v1143 = vunpack.c.l.b16 %v1119
        %v1144 = vunpack.c.l.b16 %v1120
        %v1145 = vunpack.c.l.b16 %v1121
        %v1146 = vunpack.c.l.b16 %v1122
        %v1147 = vunpack.c.l.b16 %v1123
        %v1148 = vpack.c.b16 %v1141, %v1140
        %v1149 = vpack.c.b16 %v1143, %v1142
        %v1150 = vpack.c.b16 %v1145, %v1144
        %v1151 = vpack.c.b16 %v1147, %v1146
        %v1157 = vsel %vm578, %v1125, 0
        %1159 = vmatprep.subr.bf16.mxu0 0
        %1160 = vmatpush1.bf16.msra.mxu0 %v1148
        %1161 = vmatprep.subr.bf16.mxu0 0
        %1162 = vmatpush1.bf16.msra.mxu0 %v1149
        %1163 = vmatprep.subr.bf16.mxu0 0
        %1164 = vmatpush1.bf16.msra.mxu0 %v1150
        %1165 = vmatprep.subr.bf16.mxu0 0
        %1166 = vmatpush1.bf16.msra.mxu0 %v1151
        %1167 = vmatprep.subr.bf16.mxu0 0
        %1168 = vmatpush1.bf16.msra.mxu0 0
        %1169 = vmatprep.subr.bf16.mxu0 0
        %1170 = vmatpush1.bf16.msra.mxu0 0
        %1171 = vmatprep.subr.bf16.mxu0 0
        %1172 = vmatpush1.bf16.msra.mxu0 0
        %1173 = vmatprep.subr.bf16.mxu0 0
        %1174 = vmatpush1.bf16.msra.mxu0 0
        %1175 = vmatprep.subr.bf16.mxu0 0
        %1176 = vmatpush1.bf16.msra.mxu0 0
        %1177 = vmatprep.subr.bf16.mxu0 0
        %1178 = vmatpush1.bf16.msra.mxu0 0
        %1179 = vmatprep.subr.bf16.mxu0 0
        %1180 = vmatpush1.bf16.msra.mxu0 0
        %1181 = vmatprep.subr.bf16.mxu0 0
        %1182 = vmatpush1.bf16.msra.mxu0 0
        %1183 = vmatprep.subr.bf16.mxu0 0
        %1184 = vmatpush1.bf16.msra.mxu0 0
        %1185 = vmatprep.subr.bf16.mxu0 0
        %1186 = vmatpush1.bf16.msra.mxu0 0
        %1187 = vmatprep.subr.bf16.mxu0 0
        %1188 = vmatpush1.bf16.msra.mxu0 0
        %1189 = vmatprep.subr.bf16.mxu0 0
        %1190 = vmatpush1.bf16.msra.mxu0 0
        %1191 = vmatprep.mubr.bf16.mxu0 0
        %1192 = vmatmul.mubr.bf16.gmra.mrb[0].mxu0 %v1157
        %v1193 = vpop.f32.mrb[0].mxu0
        %v1194 = vadd.f32 %v1130, %v1193
        %v1195 = vpop.f32.mrb[0].mxu0
        %v1196 = vpop.f32.mrb[0].mxu0
        %v1197 = vpop.f32.mrb[0].mxu0
        %1198 = vdwg.mxu0
        %v1199 = vadd.f32 %v647, %v1194
        %v1200 = vsel %vm623, %v1199, 0.0
        %1201 = vadd.xlane.f32.xlu0 %v1200
        %v1202 = vpop.xlane.xlu0 %1201
        %v1203 = vmul.f32 %v1202, %v627
        %v1204 = vsub.f32 %v1199, %v1203
        %v1205 = vmul.f32 %v1204, %v1204
        %v1206 = vsel %vm623, %v1205, 0.0
        %1207 = vadd.xlane.f32.xlu0 %v1206
        %v1208 = vpop.xlane.xlu0 %1207
        %v1209 = vmul.f32 %v1208, %v627
        %v1210 = vadd.f32 %v1209, 1e-05
        %v1211 = vrsqrt.pop %v1210
        %v1212 = vmul.f32 %v1204, %v1211
        %v1213 = vlaneseq
        %v1214 = vshrl.u32 %v1213, 7
        %v1215 = vsub.s32 2, %v1214
        %v1216 = vrot.slane %v648, %v1215
        %v1217 = vmul.f32 %v1212, %v1216
        %v1218 = vlaneseq
        %v1219 = vshrl.u32 %v1218, 7
        %v1220 = vsub.s32 3, %v1219
        %v1221 = vrot.slane %v648, %v1220
        %v1222 = vadd.f32 %v1217, %v1221
        %v1223 = vld [vmem:[%s9] sm:$0xf]
        %v1224 = vld [vmem:[%s9 + $0x4] sm:$0xf]
        %v1225 = vld [vmem:[%s9 + $0x8] sm:$0xf]
        %v1226 = vld [vmem:[%s9 + $0xc] sm:$0xf]
        %v1227 = vld [vmem:[%s9 + $0x10] sm:$0xf]
        %v1228 = vld [vmem:[%s9 + $0x14] sm:$0xf]
        %v1229 = vld [vmem:[%s9 + $0x18] sm:$0xf]
        %v1230 = vld [vmem:[%s9 + $0x1c] sm:$0xf]
        %v1231 = vld [vmem:[%s10] sm:$0x1]
        %v1232 = vpack.c.bf16 %v1222, %v1222
        %v1234 = vlaneseq
        %v1235 = vshrl.u32 %v1234, 7
        %v1236 = vsub.s32 0, %v1235
        %v1237 = vrot.slane %v1231, %v1236
        %v1247 = vunpack.c.l.b16 %v1223
        %v1248 = vunpack.c.l.b16 %v1224
        %v1249 = vunpack.c.l.b16 %v1225
        %v1250 = vunpack.c.l.b16 %v1226
        %v1251 = vunpack.c.l.b16 %v1227
        %v1252 = vunpack.c.l.b16 %v1228
        %v1253 = vunpack.c.l.b16 %v1229
        %v1254 = vunpack.c.l.b16 %v1230
        %v1255 = vpack.c.b16 %v1248, %v1247
        %v1256 = vpack.c.b16 %v1250, %v1249
        %v1257 = vpack.c.b16 %v1252, %v1251
        %v1258 = vpack.c.b16 %v1254, %v1253
        %v1264 = vsel %vm578, %v1232, 0
        %1266 = vmatprep.subr.bf16.mxu0 0
        %1267 = vmatpush1.bf16.msra.mxu0 %v1255
        %1268 = vmatprep.subr.bf16.mxu0 0
        %1269 = vmatpush1.bf16.msra.mxu0 %v1256
        %1270 = vmatprep.subr.bf16.mxu0 0
        %1271 = vmatpush1.bf16.msra.mxu0 %v1257
        %1272 = vmatprep.subr.bf16.mxu0 0
        %1273 = vmatpush1.bf16.msra.mxu0 %v1258
        %1274 = vmatprep.subr.bf16.mxu0 0
        %1275 = vmatpush1.bf16.msra.mxu0 0
        %1276 = vmatprep.subr.bf16.mxu0 0
        %1277 = vmatpush1.bf16.msra.mxu0 0
        %1278 = vmatprep.subr.bf16.mxu0 0
        %1279 = vmatpush1.bf16.msra.mxu0 0
        %1280 = vmatprep.subr.bf16.mxu0 0
        %1281 = vmatpush1.bf16.msra.mxu0 0
        %1282 = vmatprep.subr.bf16.mxu0 0
        %1283 = vmatpush1.bf16.msra.mxu0 0
        %1284 = vmatprep.subr.bf16.mxu0 0
        %1285 = vmatpush1.bf16.msra.mxu0 0
        %1286 = vmatprep.subr.bf16.mxu0 0
        %1287 = vmatpush1.bf16.msra.mxu0 0
        %1288 = vmatprep.subr.bf16.mxu0 0
        %1289 = vmatpush1.bf16.msra.mxu0 0
        %1290 = vmatprep.subr.bf16.mxu0 0
        %1291 = vmatpush1.bf16.msra.mxu0 0
        %1292 = vmatprep.subr.bf16.mxu0 0
        %1293 = vmatpush1.bf16.msra.mxu0 0
        %1294 = vmatprep.subr.bf16.mxu0 0
        %1295 = vmatpush1.bf16.msra.mxu0 0
        %1296 = vmatprep.subr.bf16.mxu0 0
        %1297 = vmatpush1.bf16.msra.mxu0 0
        %1298 = vmatprep.mubr.bf16.mxu0 0
        %1299 = vmatmul.mubr.bf16.gmra.mrb[0].mxu0 %v1264
        %v1300 = vpop.f32.mrb[0].mxu0
        %v1301 = vadd.f32 %v1237, %v1300
        %v1302 = vpop.f32.mrb[0].mxu0
        %v1303 = vpop.f32.mrb[0].mxu0
        %v1304 = vpop.f32.mrb[0].mxu0
        %1305 = vdwg.mxu0
        %v1306 = vmul.f32 %v1301, 1.702
        %v1307 = vxor.u32 %v1306, 2147483648
        %v1308 = vmul.f32 %v1307, 1.442695
        %v1309 = vpow.pop %v1308
        %v1310 = vadd.f32 %v1309, 1.0
        %v1311 = vrcp.pop %v1310
        %v1312 = vmul.f32 1.0, %v1311
        %v1313 = vmul.f32 %v1301, %v1312
        %v1314 = vld [vmem:[%s11] sm:$0xf]
        %v1315 = vld [vmem:[%s11 + $0x4] sm:$0xf]
        %v1316 = vld [vmem:[%s11 + $0x8] sm:$0xf]
        %v1317 = vld [vmem:[%s11 + $0xc] sm:$0xf]
        %v1318 = vld [vmem:[%s11 + $0x10] sm:$0xf]
        %v1319 = vld [vmem:[%s11 + $0x14] sm:$0xf]
        %v1320 = vld [vmem:[%s11 + $0x18] sm:$0xf]
        %v1321 = vld [vmem:[%s11 + $0x1c] sm:$0xf]
        %v1322 = vld [vmem:[%s11 + $0x20] sm:$0xf]
        %v1323 = vld [vmem:[%s11 + $0x24] sm:$0xf]
        %v1324 = vld [vmem:[%s11 + $0x28] sm:$0xf]
        %v1325 = vld [vmem:[%s11 + $0x2c] sm:$0xf]
        %v1326 = vld [vmem:[%s11 + $0x30] sm:$0xf]
        %v1327 = vld [vmem:[%s11 + $0x34] sm:$0xf]
        %v1328 = vld [vmem:[%s11 + $0x38] sm:$0xf]
        %v1329 = vld [vmem:[%s11 + $0x3c] sm:$0xf]
        %v1330 = vld [vmem:[%s12] sm:$0x1]
        %v1331 = vpack.c.bf16 %v1313, %v1313
        %v1333 = vlaneseq
        %v1334 = vshrl.u32 %v1333, 7
        %v1335 = vsub.s32 0, %v1334
        %v1336 = vrot.slane %v1330, %v1335
        %v1354 = vunpack.c.l.b16 %v1314
        %v1355 = vunpack.c.l.b16 %v1315
        %v1356 = vunpack.c.l.b16 %v1316
        %v1357 = vunpack.c.l.b16 %v1317
        %v1358 = vunpack.c.l.b16 %v1318
        %v1359 = vunpack.c.l.b16 %v1319
        %v1360 = vunpack.c.l.b16 %v1320
        %v1361 = vunpack.c.l.b16 %v1321
        %v1362 = vunpack.c.l.b16 %v1322
        %v1363 = vunpack.c.l.b16 %v1323
        %v1364 = vunpack.c.l.b16 %v1324
        %v1365 = vunpack.c.l.b16 %v1325
        %v1366 = vunpack.c.l.b16 %v1326
        %v1367 = vunpack.c.l.b16 %v1327
        %v1368 = vunpack.c.l.b16 %v1328
        %v1369 = vunpack.c.l.b16 %v1329
        %v1370 = vpack.c.b16 %v1355, %v1354
        %v1371 = vpack.c.b16 %v1357, %v1356
        %v1372 = vpack.c.b16 %v1359, %v1358
        %v1373 = vpack.c.b16 %v1361, %v1360
        %v1374 = vpack.c.b16 %v1363, %v1362
        %v1375 = vpack.c.b16 %v1365, %v1364
        %v1376 = vpack.c.b16 %v1367, %v1366
        %v1377 = vpack.c.b16 %v1369, %v1368
        %1386 = vmatprep.subr.bf16.mxu0 0
        %1387 = vmatpush1.bf16.msra.mxu0 %v1370
        %1388 = vmatprep.subr.bf16.mxu0 0
        %1389 = vmatpush1.bf16.msra.mxu0 %v1371
        %1390 = vmatprep.subr.bf16.mxu0 0
        %1391 = vmatpush1.bf16.msra.mxu0 %v1372
        %1392 = vmatprep.subr.bf16.mxu0 0
        %1393 = vmatpush1.bf16.msra.mxu0 %v1373
        %1394 = vmatprep.subr.bf16.mxu0 0
        %1395 = vmatpush1.bf16.msra.mxu0 %v1374
        %1396 = vmatprep.subr.bf16.mxu0 0
        %1397 = vmatpush1.bf16.msra.mxu0 %v1375
        %1398 = vmatprep.subr.bf16.mxu0 0
        %1399 = vmatpush1.bf16.msra.mxu0 %v1376
        %1400 = vmatprep.subr.bf16.mxu0 0
        %1401 = vmatpush1.bf16.msra.mxu0 %v1377
        %1402 = vmatprep.subr.bf16.mxu0 0
        %1403 = vmatpush1.bf16.msra.mxu0 0
        %1404 = vmatprep.subr.bf16.mxu0 0
        %1405 = vmatpush1.bf16.msra.mxu0 0
        %1406 = vmatprep.subr.bf16.mxu0 0
        %1407 = vmatpush1.bf16.msra.mxu0 0
        %1408 = vmatprep.subr.bf16.mxu0 0
        %1409 = vmatpush1.bf16.msra.mxu0 0
        %1410 = vmatprep.subr.bf16.mxu0 0
        %1411 = vmatpush1.bf16.msra.mxu0 0
        %1412 = vmatprep.subr.bf16.mxu0 0
        %1413 = vmatpush1.bf16.msra.mxu0 0
        %1414 = vmatprep.subr.bf16.mxu0 0
        %1415 = vmatpush1.bf16.msra.mxu0 0
        %1416 = vmatprep.subr.bf16.mxu0 0
        %1417 = vmatpush1.bf16.msra.mxu0 0
        %1418 = vmatprep.mubr.bf16.mxu0 0
        %1419 = vmatmul.mubr.bf16.gmra.mrb[0].mxu0 %v1331
        %v1420 = vpop.f32.mrb[0].mxu0
        %v1421 = vadd.f32 %v1336, %v1420
        %v1422 = vpop.f32.mrb[0].mxu0
        %v1423 = vpop.f32.mrb[0].mxu0
        %v1424 = vpop.f32.mrb[0].mxu0
        %1425 = vdwg.mxu0
        %v1426 = vadd.f32 %v1199, %v1421
        %s1427 = scalar_lea.vmem %s4, 4
        %v1428 = vld [vmem:[%s1427] sm:$0xf]
        %v1429 = vsel %vm623, %v1426, 0.0
        %1430 = vadd.xlane.f32.xlu0 %v1429
        %v1431 = vpop.xlane.xlu0 %1430
        %v1432 = vmul.f32 %v1431, %v627
        %v1433 = vsub.f32 %v1426, %v1432
        %v1434 = vmul.f32 %v1433, %v1433
        %v1435 = vsel %vm623, %v1434, 0.0
        %1436 = vadd.xlane.f32.xlu0 %v1435
        %v1437 = vpop.xlane.xlu0 %1436
        %v1438 = vmul.f32 %v1437, %v627
        %v1439 = vadd.f32 %v1438, 1e-05
        %v1440 = vrsqrt.pop %v1439
        %v1441 = vmul.f32 %v1433, %v1440
        %v1442 = vlaneseq
        %v1443 = vshrl.u32 %v1442, 7
        %v1444 = vsub.s32 0, %v1443
        %v1445 = vrot.slane %v1428, %v1444
        %v1446 = vmul.f32 %v1441, %v1445
        %v1447 = vlaneseq
        %v1448 = vshrl.u32 %v1447, 7
        %v1449 = vsub.s32 1, %v1448
        %v1450 = vrot.slane %v1428, %v1449
        %v1451 = vadd.f32 %v1446, %v1450
        %s1452 = scalar_lea.vmem %s5, 64
        %v1453 = vld [vmem:[%s1452] sm:$0xff]
        %v1454 = vld [vmem:[%s1452 + $0x8] sm:$0xff]
        %v1455 = vld [vmem:[%s1452 + $0x10] sm:$0xff]
        %v1456 = vld [vmem:[%s1452 + $0x18] sm:$0xff]
        %v1457 = vld [vmem:[%s1452 + $0x20] sm:$0xff]
        %v1458 = vld [vmem:[%s1452 + $0x28] sm:$0xff]
        %v1459 = vld [vmem:[%s1452 + $0x30] sm:$0xff]
        %v1460 = vld [vmem:[%s1452 + $0x38] sm:$0xff]
        %s1461 = scalar_lea.vmem %s6, 2
        %v1462 = vld [vmem:[%s1461] sm:$0x3]
        %v1463 = vpack.c.bf16 %v1451, %v1451
        %v1465 = vlaneseq
        %v1466 = vshrl.u32 %v1465, 7
        %v1467 = vsub.s32 0, %v1466
        %v1468 = vrot.slane %v1462, %v1467
        %v1469 = vlaneseq
        %v1470 = vshrl.u32 %v1469, 7
        %v1471 = vsub.s32 1, %v1470
        %v1472 = vrot.slane %v1462, %v1471
        %v1483 = vunpack.c.l.b16 %v1453
        %v1484 = vunpack.c.h.b16 %v1453
        %v1485 = vunpack.c.l.b16 %v1454
        %v1486 = vunpack.c.h.b16 %v1454
        %v1487 = vunpack.c.l.b16 %v1455
        %v1488 = vunpack.c.h.b16 %v1455
        %v1489 = vunpack.c.l.b16 %v1456
        %v1490 = vunpack.c.h.b16 %v1456
        %v1491 = vunpack.c.l.b16 %v1457
        %v1492 = vunpack.c.h.b16 %v1457
        %v1493 = vunpack.c.l.b16 %v1458
        %v1494 = vunpack.c.h.b16 %v1458
        %v1495 = vunpack.c.l.b16 %v1459
        %v1496 = vunpack.c.h.b16 %v1459
        %v1497 = vunpack.c.l.b16 %v1460
        %v1498 = vunpack.c.h.b16 %v1460
        %v1499 = vpack.c.b16 %v1485, %v1483
        %v1500 = vpack.c.b16 %v1486, %v1484
        %v1501 = vpack.c.b16 %v1489, %v1487
        %v1502 = vpack.c.b16 %v1490, %v1488
        %v1503 = vpack.c.b16 %v1493, %v1491
        %v1504 = vpack.c.b16 %v1494, %v1492
        %v1505 = vpack.c.b16 %v1497, %v1495
        %v1506 = vpack.c.b16 %v1498, %v1496
        %v1516 = vsel %vm578, %v1463, 0
        %1518 = vmatprep.subr.bf16.mxu0 %v1500
        %1519 = vmatpush1.bf16.msra.mxu0 %v1499
        %1520 = vmatprep.subr.bf16.mxu0 %v1502
        %1521 = vmatpush1.bf16.msra.mxu0 %v1501
        %1522 = vmatprep.subr.bf16.mxu0 %v1504
        %1523 = vmatpush1.bf16.msra.mxu0 %v1503
        %1524 = vmatprep.subr.bf16.mxu0 %v1506
        %1525 = vmatpush1.bf16.msra.mxu0 %v1505
        %1526 = vmatprep.subr.bf16.mxu0 0
        %1527 = vmatpush1.bf16.msra.mxu0 0
        %1528 = vmatprep.subr.bf16.mxu0 0
        %1529 = vmatpush1.bf16.msra.mxu0 0
        %1530 = vmatprep.subr.bf16.mxu0 0
        %1531 = vmatpush1.bf16.msra.mxu0 0
        %1532 = vmatprep.subr.bf16.mxu0 0
        %1533 = vmatpush1.bf16.msra.mxu0 0
        %1534 = vmatprep.subr.bf16.mxu0 0
        %1535 = vmatpush1.bf16.msra.mxu0 0
        %1536 = vmatprep.subr.bf16.mxu0 0
        %1537 = vmatpush1.bf16.msra.mxu0 0
        %1538 = vmatprep.subr.bf16.mxu0 0
        %1539 = vmatpush1.bf16.msra.mxu0 0
        %1540 = vmatprep.subr.bf16.mxu0 0
        %1541 = vmatpush1.bf16.msra.mxu0 0
        %1542 = vmatprep.subr.bf16.mxu0 0
        %1543 = vmatpush1.bf16.msra.mxu0 0
        %1544 = vmatprep.subr.bf16.mxu0 0
        %1545 = vmatpush1.bf16.msra.mxu0 0
        %1546 = vmatprep.subr.bf16.mxu0 0
        %1547 = vmatpush1.bf16.msra.mxu0 0
        %1548 = vmatprep.subr.bf16.mxu0 0
        %1549 = vmatpush1.bf16.msra.mxu0 0
        %1550 = vmatprep.mubr.bf16.mxu0 0
        %1551 = vmatmul.mubr.bf16.gmra.mrb[0].mxu0 %v1516
        %v1552 = vpop.f32.mrb[0].mxu0
        %v1553 = vadd.f32 %v1468, %v1552
        %v1554 = vpop.f32.mrb[0].mxu0
        %v1555 = vadd.f32 %v1472, %v1554
        %v1556 = vpop.f32.mrb[0].mxu0
        %v1557 = vpop.f32.mrb[0].mxu0
        %1558 = vdwg.mxu0
        %1560 = vrot.lane.b32.xlu0 %v1553, 64
        %v1561 = vpop.permute.xlu0 %1560
        %v1562 = vsel %vm780, %v1553, 0
        %v1564 = vsel %vm780, %v1561, 0
        %1566 = vmatprep.subr.mxu0 0.0
        %1567 = vmatpush1.xpose.msra.mxu0 %v1564
        %1568 = vmatprep.subr.mxu0 0.0
        %1569 = vmatpush1.xpose.msra.mxu0 0.0
        %1570 = vmatprep.subr.mxu0 0.0
        %1571 = vmatpush1.xpose.msra.mxu0 0.0
        %1572 = vmatprep.subr.mxu0 0.0
        %1573 = vmatpush1.xpose.msra.mxu0 0.0
        %1574 = vmatprep.subr.mxu0 0.0
        %1575 = vmatpush1.xpose.msra.mxu0 0.0
        %1576 = vmatprep.subr.mxu0 0.0
        %1577 = vmatpush1.xpose.msra.mxu0 0.0
        %1578 = vmatprep.subr.mxu0 0.0
        %1579 = vmatpush1.xpose.msra.mxu0 0.0
        %1580 = vmatprep.subr.mxu0 0.0
        %1581 = vmatpush1.xpose.msra.mxu0 0.0
        %1582 = vmatprep.subr.mxu0 0.0
        %1583 = vmatpush1.xpose.msra.mxu0 0.0
        %1584 = vmatprep.subr.mxu0 0.0
        %1585 = vmatpush1.xpose.msra.mxu0 0.0
        %1586 = vmatprep.subr.mxu0 0.0
        %1587 = vmatpush1.xpose.msra.mxu0 0.0
        %1588 = vmatprep.subr.mxu0 0.0
        %1589 = vmatpush1.xpose.msra.mxu0 0.0
        %1590 = vmatprep.subr.mxu0 0.0
        %1591 = vmatpush1.xpose.msra.mxu0 0.0
        %1592 = vmatprep.subr.mxu0 0.0
        %1593 = vmatpush1.xpose.msra.mxu0 0.0
        %1594 = vmatprep.subr.mxu0 0.0
        %1595 = vmatpush1.xpose.msra.mxu0 0.0
        %1596 = vmatprep.subr.mxu0 0.0
        %1597 = vmatpush1.xpose.msra.mxu0 0.0
        %1598 = vmatprep.subr.mxu0 0.0
        %1599 = vmatpush1.xpose.msra.mxu0 0.0
        %1600 = vmatprep.subr.mxu0 0.0
        %1601 = vmatpush1.xpose.msra.mxu0 0.0
        %1602 = vmatprep.subr.mxu0 0.0
        %1603 = vmatpush1.xpose.msra.mxu0 0.0
        %1604 = vmatprep.subr.mxu0 0.0
        %1605 = vmatpush1.xpose.msra.mxu0 0.0
        %1606 = vmatprep.subr.mxu0 0.0
        %1607 = vmatpush1.xpose.msra.mxu0 0.0
        %1608 = vmatprep.subr.mxu0 0.0
        %1609 = vmatpush1.xpose.msra.mxu0 0.0
        %1610 = vmatprep.subr.mxu0 0.0
        %1611 = vmatpush1.xpose.msra.mxu0 0.0
        %1612 = vmatprep.subr.mxu0 0.0
        %1613 = vmatpush1.xpose.msra.mxu0 0.0
        %1614 = vmatprep.subr.mxu0 0.0
        %1615 = vmatpush1.xpose.msra.mxu0 0.0
        %1616 = vmatprep.subr.mxu0 0.0
        %1617 = vmatpush1.xpose.msra.mxu0 0.0
        %1618 = vmatprep.subr.mxu0 0.0
        %1619 = vmatpush1.xpose.msra.mxu0 0.0
        %1620 = vmatprep.subr.mxu0 0.0
        %1621 = vmatpush1.xpose.msra.mxu0 0.0
        %1622 = vmatprep.subr.mxu0 0.0
        %1623 = vmatpush1.xpose.msra.mxu0 0.0
        %1624 = vmatprep.subr.mxu0 0.0
        %1625 = vmatpush1.xpose.msra.mxu0 0.0
        %1626 = vmatprep.subr.mxu0 0.0
        %1627 = vmatpush1.xpose.msra.mxu0 0.0
        %1628 = vmatprep.subr.mxu0 0.0
        %1629 = vmatpush1.xpose.msra.mxu0 0.0
        %1630 = vmatprep.mubr.f32.mxu0 0.0
        %1631 = vmatmul.mubr.f32.gmra.mrb[0].mxu0 %v1562
        %v1632 = vpop.f32.mrb[0].mxu0
        %v1633 = vadd.f32 0.0, %v1632
        %v1634 = vpop.f32.mrb[0].mxu0
        %1635 = vdwg.mxu0
        %v1636 = vsel %vm855, %v1633, -inf
        %1637 = vmax.xlane.f32.xlu0 %v1636
        %v1638 = vpop.xlane.xlu0 %1637
        %v1639 = vsub.f32 %v1633, %v1638
        %v1640 = vmul.f32 %v1639, 1.442695
        %v1641 = vpow.pop %v1640
        %v1642 = vsel %vm855, %v1641, 0.0
        %1643 = vadd.xlane.f32.xlu0 %v1642
        %v1644 = vpop.xlane.xlu0 %1643
        %v1645 = vrcp.pop %v1644
        %v1646 = vmul.f32 %v1641, %v1645
        %v1648 = vsel %vm867, %v1646, 0
        %v1651 = vsel %vm871, %v1555, 0
        %1653 = vmatprep.subr.mxu0 0.0
        %1654 = vmatpush1.msra.mxu0 %v1651
        %1655 = vmatprep.subr.mxu0 0.0
        %1656 = vmatpush1.msra.mxu0 0.0
        %1657 = vmatprep.subr.mxu0 0.0
        %1658 = vmatpush1.msra.mxu0 0.0
        %1659 = vmatprep.subr.mxu0 0.0
        %1660 = vmatpush1.msra.mxu0 0.0
        %1661 = vmatprep.subr.mxu0 0.0
        %1662 = vmatpush1.msra.mxu0 0.0
        %1663 = vmatprep.subr.mxu0 0.0
        %1664 = vmatpush1.msra.mxu0 0.0
        %1665 = vmatprep.subr.mxu0 0.0
        %1666 = vmatpush1.msra.mxu0 0.0
        %1667 = vmatprep.subr.mxu0 0.0
        %1668 = vmatpush1.msra.mxu0 0.0
        %1669 = vmatprep.subr.mxu0 0.0
        %1670 = vmatpush1.msra.mxu0 0.0
        %1671 = vmatprep.subr.mxu0 0.0
        %1672 = vmatpush1.msra.mxu0 0.0
        %1673 = vmatprep.subr.mxu0 0.0
        %1674 = vmatpush1.msra.mxu0 0.0
        %1675 = vmatprep.subr.mxu0 0.0
        %1676 = vmatpush1.msra.mxu0 0.0
        %1677 = vmatprep.subr.mxu0 0.0
        %1678 = vmatpush1.msra.mxu0 0.0
        %1679 = vmatprep.subr.mxu0 0.0
        %1680 = vmatpush1.msra.mxu0 0.0
        %1681 = vmatprep.subr.mxu0 0.0
        %1682 = vmatpush1.msra.mxu0 0.0
        %1683 = vmatprep.subr.mxu0 0.0
        %1684 = vmatpush1.msra.mxu0 0.0
        %1685 = vmatprep.subr.mxu0 0.0
        %1686 = vmatpush1.msra.mxu0 0.0
        %1687 = vmatprep.subr.mxu0 0.0
        %1688 = vmatpush1.msra.mxu0 0.0
        %1689 = vmatprep.subr.mxu0 0.0
        %1690 = vmatpush1.msra.mxu0 0.0
        %1691 = vmatprep.subr.mxu0 0.0
        %1692 = vmatpush1.msra.mxu0 0.0
        %1693 = vmatprep.subr.mxu0 0.0
        %1694 = vmatpush1.msra.mxu0 0.0
        %1695 = vmatprep.subr.mxu0 0.0
        %1696 = vmatpush1.msra.mxu0 0.0
        %1697 = vmatprep.subr.mxu0 0.0
        %1698 = vmatpush1.msra.mxu0 0.0
        %1699 = vmatprep.subr.mxu0 0.0
        %1700 = vmatpush1.msra.mxu0 0.0
        %1701 = vmatprep.subr.mxu0 0.0
        %1702 = vmatpush1.msra.mxu0 0.0
        %1703 = vmatprep.subr.mxu0 0.0
        %1704 = vmatpush1.msra.mxu0 0.0
        %1705 = vmatprep.subr.mxu0 0.0
        %1706 = vmatpush1.msra.mxu0 0.0
        %1707 = vmatprep.subr.mxu0 0.0
        %1708 = vmatpush1.msra.mxu0 0.0
        %1709 = vmatprep.subr.mxu0 0.0
        %1710 = vmatpush1.msra.mxu0 0.0
        %1711 = vmatprep.subr.mxu0 0.0
        %1712 = vmatpush1.msra.mxu0 0.0
        %1713 = vmatprep.subr.mxu0 0.0
        %1714 = vmatpush1.msra.mxu0 0.0
        %1715 = vmatprep.subr.mxu0 0.0
        %1716 = vmatpush1.msra.mxu0 0.0
        %1717 = vmatprep.mubr.f32.mxu0 0.0
        %1718 = vmatmul.mubr.f32.gmra.mrb[0].mxu0 %v1648
        %v1719 = vpop.f32.mrb[0].mxu0
        %v1720 = vadd.f32 0.0, %v1719
        %v1721 = vpop.f32.mrb[0].mxu0
        %1722 = vdwg.mxu0
        %1723 = vrot.lane.b32.xlu0 %v1553, 96
        %v1724 = vpop.permute.xlu0 %1723
        %1725 = vrot.lane.b32.xlu0 %v1553, 32
        %v1726 = vpop.permute.xlu0 %1725
        %v1727 = vsel %vm780, %v1724, 0
        %v1729 = vsel %vm780, %v1726, 0
        %1731 = vmatprep.subr.mxu0 0.0
        %1732 = vmatpush1.xpose.msra.mxu0 %v1729
        %1733 = vmatprep.subr.mxu0 0.0
        %1734 = vmatpush1.xpose.msra.mxu0 0.0
        %1735 = vmatprep.subr.mxu0 0.0
        %1736 = vmatpush1.xpose.msra.mxu0 0.0
        %1737 = vmatprep.subr.mxu0 0.0
        %1738 = vmatpush1.xpose.msra.mxu0 0.0
        %1739 = vmatprep.subr.mxu0 0.0
        %1740 = vmatpush1.xpose.msra.mxu0 0.0
        %1741 = vmatprep.subr.mxu0 0.0
        %1742 = vmatpush1.xpose.msra.mxu0 0.0
        %1743 = vmatprep.subr.mxu0 0.0
        %1744 = vmatpush1.xpose.msra.mxu0 0.0
        %1745 = vmatprep.subr.mxu0 0.0
        %1746 = vmatpush1.xpose.msra.mxu0 0.0
        %1747 = vmatprep.subr.mxu0 0.0
        %1748 = vmatpush1.xpose.msra.mxu0 0.0
        %1749 = vmatprep.subr.mxu0 0.0
        %1750 = vmatpush1.xpose.msra.mxu0 0.0
        %1751 = vmatprep.subr.mxu0 0.0
        %1752 = vmatpush1.xpose.msra.mxu0 0.0
        %1753 = vmatprep.subr.mxu0 0.0
        %1754 = vmatpush1.xpose.msra.mxu0 0.0
        %1755 = vmatprep.subr.mxu0 0.0
        %1756 = vmatpush1.xpose.msra.mxu0 0.0
        %1757 = vmatprep.subr.mxu0 0.0
        %1758 = vmatpush1.xpose.msra.mxu0 0.0
        %1759 = vmatprep.subr.mxu0 0.0
        %1760 = vmatpush1.xpose.msra.mxu0 0.0
        %1761 = vmatprep.subr.mxu0 0.0
        %1762 = vmatpush1.xpose.msra.mxu0 0.0
        %1763 = vmatprep.subr.mxu0 0.0
        %1764 = vmatpush1.xpose.msra.mxu0 0.0
        %1765 = vmatprep.subr.mxu0 0.0
        %1766 = vmatpush1.xpose.msra.mxu0 0.0
        %1767 = vmatprep.subr.mxu0 0.0
        %1768 = vmatpush1.xpose.msra.mxu0 0.0
        %1769 = vmatprep.subr.mxu0 0.0
        %1770 = vmatpush1.xpose.msra.mxu0 0.0
        %1771 = vmatprep.subr.mxu0 0.0
        %1772 = vmatpush1.xpose.msra.mxu0 0.0
        %1773 = vmatprep.subr.mxu0 0.0
        %1774 = vmatpush1.xpose.msra.mxu0 0.0
        %1775 = vmatprep.subr.mxu0 0.0
        %1776 = vmatpush1.xpose.msra.mxu0 0.0
        %1777 = vmatprep.subr.mxu0 0.0
        %1778 = vmatpush1.xpose.msra.mxu0 0.0
        %1779 = vmatprep.subr.mxu0 0.0
        %1780 = vmatpush1.xpose.msra.mxu0 0.0
        %1781 = vmatprep.subr.mxu0 0.0
        %1782 = vmatpush1.xpose.msra.mxu0 0.0
        %1783 = vmatprep.subr.mxu0 0.0
        %1784 = vmatpush1.xpose.msra.mxu0 0.0
        %1785 = vmatprep.subr.mxu0 0.0
        %1786 = vmatpush1.xpose.msra.mxu0 0.0
        %1787 = vmatprep.subr.mxu0 0.0
        %1788 = vmatpush1.xpose.msra.mxu0 0.0
        %1789 = vmatprep.subr.mxu0 0.0
        %1790 = vmatpush1.xpose.msra.mxu0 0.0
        %1791 = vmatprep.subr.mxu0 0.0
        %1792 = vmatpush1.xpose.msra.mxu0 0.0
        %1793 = vmatprep.subr.mxu0 0.0
        %1794 = vmatpush1.xpose.msra.mxu0 0.0
        %1795 = vmatprep.mubr.f32.mxu0 0.0
        %1796 = vmatmul.mubr.f32.gmra.mrb[0].mxu0 %v1727
        %v1797 = vpop.f32.mrb[0].mxu0
        %v1798 = vadd.f32 0.0, %v1797
        %v1799 = vpop.f32.mrb[0].mxu0
        %1800 = vdwg.mxu0
        %v1801 = vsel %vm855, %v1798, -inf
        %1802 = vmax.xlane.f32.xlu0 %v1801
        %v1803 = vpop.xlane.xlu0 %1802
        %v1804 = vsub.f32 %v1798, %v1803
        %v1805 = vmul.f32 %v1804, 1.442695
        %v1806 = vpow.pop %v1805
        %v1807 = vsel %vm855, %v1806, 0.0
        %1808 = vadd.xlane.f32.xlu0 %v1807
        %v1809 = vpop.xlane.xlu0 %1808
        %v1810 = vrcp.pop %v1809
        %v1811 = vmul.f32 %v1806, %v1810
        %1812 = vrot.lane.b32.xlu0 %v1555, 96
        %v1813 = vpop.permute.xlu0 %1812
        %v1815 = vsel %vm867, %v1811, 0
        %v1817 = vsel %vm871, %v1813, 0
        %1819 = vmatprep.subr.mxu0 0.0
        %1820 = vmatpush1.msra.mxu0 %v1817
        %1821 = vmatprep.subr.mxu0 0.0
        %1822 = vmatpush1.msra.mxu0 0.0
        %1823 = vmatprep.subr.mxu0 0.0
        %1824 = vmatpush1.msra.mxu0 0.0
        %1825 = vmatprep.subr.mxu0 0.0
        %1826 = vmatpush1.msra.mxu0 0.0
        %1827 = vmatprep.subr.mxu0 0.0
        %1828 = vmatpush1.msra.mxu0 0.0
        %1829 = vmatprep.subr.mxu0 0.0
        %1830 = vmatpush1.msra.mxu0 0.0
        %1831 = vmatprep.subr.mxu0 0.0
        %1832 = vmatpush1.msra.mxu0 0.0
        %1833 = vmatprep.subr.mxu0 0.0
        %1834 = vmatpush1.msra.mxu0 0.0
        %1835 = vmatprep.subr.mxu0 0.0
        %1836 = vmatpush1.msra.mxu0 0.0
        %1837 = vmatprep.subr.mxu0 0.0
        %1838 = vmatpush1.msra.mxu0 0.0
        %1839 = vmatprep.subr.mxu0 0.0
        %1840 = vmatpush1.msra.mxu0 0.0
        %1841 = vmatprep.subr.mxu0 0.0
        %1842 = vmatpush1.msra.mxu0 0.0
        %1843 = vmatprep.subr.mxu0 0.0
        %1844 = vmatpush1.msra.mxu0 0.0
        %1845 = vmatprep.subr.mxu0 0.0
        %1846 = vmatpush1.msra.mxu0 0.0
        %1847 = vmatprep.subr.mxu0 0.0
        %1848 = vmatpush1.msra.mxu0 0.0
        %1849 = vmatprep.subr.mxu0 0.0
        %1850 = vmatpush1.msra.mxu0 0.0
        %1851 = vmatprep.subr.mxu0 0.0
        %1852 = vmatpush1.msra.mxu0 0.0
        %1853 = vmatprep.subr.mxu0 0.0
        %1854 = vmatpush1.msra.mxu0 0.0
        %1855 = vmatprep.subr.mxu0 0.0
        %1856 = vmatpush1.msra.mxu0 0.0
        %1857 = vmatprep.subr.mxu0 0.0
        %1858 = vmatpush1.msra.mxu0 0.0
        %1859 = vmatprep.subr.mxu0 0.0
        %1860 = vmatpush1.msra.mxu0 0.0
        %1861 = vmatprep.subr.mxu0 0.0
        %1862 = vmatpush1.msra.mxu0 0.0
        %1863 = vmatprep.subr.mxu0 0.0
        %1864 = vmatpush1.msra.mxu0 0.0
        %1865 = vmatprep.subr.mxu0 0.0
        %1866 = vmatpush1.msra.mxu0 0.0
        %1867 = vmatprep.subr.mxu0 0.0
        %1868 = vmatpush1.msra.mxu0 0.0
        %1869 = vmatprep.subr.mxu0 0.0
        %1870 = vmatpush1.msra.mxu0 0.0
        %1871 = vmatprep.subr.mxu0 0.0
        %1872 = vmatpush1.msra.mxu0 0.0
        %1873 = vmatprep.subr.mxu0 0.0
        %1874 = vmatpush1.msra.mxu0 0.0
        %1875 = vmatprep.subr.mxu0 0.0
        %1876 = vmatpush1.msra.mxu0 0.0
        %1877 = vmatprep.subr.mxu0 0.0
        %1878 = vmatpush1.msra.mxu0 0.0
        %1879 = vmatprep.subr.mxu0 0.0
        %1880 = vmatpush1.msra.mxu0 0.0
        %1881 = vmatprep.subr.mxu0 0.0
        %1882 = vmatpush1.msra.mxu0 0.0
        %1883 = vmatprep.mubr.f32.mxu0 0.0
        %1884 = vmatmul.mubr.f32.gmra.mrb[0].mxu0 %v1815
        %v1885 = vpop.f32.mrb[0].mxu0
        %v1886 = vadd.f32 0.0, %v1885
        %v1887 = vpop.f32.mrb[0].mxu0
        %1888 = vdwg.mxu0
        %1890 = vrot.lane.b32.xlu0 %v1886, 32
        %v1891 = vpop.permute.xlu0 %1890
        %v1893 = vsel %vm780, %v1720, %v1891
        %s1894 = scalar_lea.vmem %s7, 32
        %v1895 = vld [vmem:[%s1894] sm:$0xf]
        %v1896 = vld [vmem:[%s1894 + $0x4] sm:$0xf]
        %v1897 = vld [vmem:[%s1894 + $0x8] sm:$0xf]
        %v1898 = vld [vmem:[%s1894 + $0xc] sm:$0xf]
        %v1899 = vld [vmem:[%s1894 + $0x10] sm:$0xf]
        %v1900 = vld [vmem:[%s1894 + $0x14] sm:$0xf]
        %v1901 = vld [vmem:[%s1894 + $0x18] sm:$0xf]
        %v1902 = vld [vmem:[%s1894 + $0x1c] sm:$0xf]
        %s1903 = scalar_lea.vmem %s8, 1
        %v1904 = vld [vmem:[%s1903] sm:$0x1]
        %v1905 = vpack.c.bf16 %v1893, %v1893
        %v1907 = vlaneseq
        %v1908 = vshrl.u32 %v1907, 7
        %v1909 = vsub.s32 0, %v1908
        %v1910 = vrot.slane %v1904, %v1909
        %v1920 = vunpack.c.l.b16 %v1895
        %v1921 = vunpack.c.l.b16 %v1896
        %v1922 = vunpack.c.l.b16 %v1897
        %v1923 = vunpack.c.l.b16 %v1898
        %v1924 = vunpack.c.l.b16 %v1899
        %v1925 = vunpack.c.l.b16 %v1900
        %v1926 = vunpack.c.l.b16 %v1901
        %v1927 = vunpack.c.l.b16 %v1902
        %v1928 = vpack.c.b16 %v1921, %v1920
        %v1929 = vpack.c.b16 %v1923, %v1922
        %v1930 = vpack.c.b16 %v1925, %v1924
        %v1931 = vpack.c.b16 %v1927, %v1926
        %v1937 = vsel %vm578, %v1905, 0
        %1939 = vmatprep.subr.bf16.mxu0 0
        %1940 = vmatpush1.bf16.msra.mxu0 %v1928
        %1941 = vmatprep.subr.bf16.mxu0 0
        %1942 = vmatpush1.bf16.msra.mxu0 %v1929
        %1943 = vmatprep.subr.bf16.mxu0 0
        %1944 = vmatpush1.bf16.msra.mxu0 %v1930
        %1945 = vmatprep.subr.bf16.mxu0 0
        %1946 = vmatpush1.bf16.msra.mxu0 %v1931
        %1947 = vmatprep.subr.bf16.mxu0 0
        %1948 = vmatpush1.bf16.msra.mxu0 0
        %1949 = vmatprep.subr.bf16.mxu0 0
        %1950 = vmatpush1.bf16.msra.mxu0 0
        %1951 = vmatprep.subr.bf16.mxu0 0
        %1952 = vmatpush1.bf16.msra.mxu0 0
        %1953 = vmatprep.subr.bf16.mxu0 0
        %1954 = vmatpush1.bf16.msra.mxu0 0
        %1955 = vmatprep.subr.bf16.mxu0 0
        %1956 = vmatpush1.bf16.msra.mxu0 0
        %1957 = vmatprep.subr.bf16.mxu0 0
        %1958 = vmatpush1.bf16.msra.mxu0 0
        %1959 = vmatprep.subr.bf16.mxu0 0
        %1960 = vmatpush1.bf16.msra.mxu0 0
        %1961 = vmatprep.subr.bf16.mxu0 0
        %1962 = vmatpush1.bf16.msra.mxu0 0
        %1963 = vmatprep.subr.bf16.mxu0 0
        %1964 = vmatpush1.bf16.msra.mxu0 0
        %1965 = vmatprep.subr.bf16.mxu0 0
        %1966 = vmatpush1.bf16.msra.mxu0 0
        %1967 = vmatprep.subr.bf16.mxu0 0
        %1968 = vmatpush1.bf16.msra.mxu0 0
        %1969 = vmatprep.subr.bf16.mxu0 0
        %1970 = vmatpush1.bf16.msra.mxu0 0
        %1971 = vmatprep.mubr.bf16.mxu0 0
        %1972 = vmatmul.mubr.bf16.gmra.mrb[0].mxu0 %v1937
        %v1973 = vpop.f32.mrb[0].mxu0
        %v1974 = vadd.f32 %v1910, %v1973
        %v1975 = vpop.f32.mrb[0].mxu0
        %v1976 = vpop.f32.mrb[0].mxu0
        %v1977 = vpop.f32.mrb[0].mxu0
        %1978 = vdwg.mxu0
        %v1979 = vadd.f32 %v1426, %v1974
        %v1980 = vsel %vm623, %v1979, 0.0
        %1981 = vadd.xlane.f32.xlu0 %v1980
        %v1982 = vpop.xlane.xlu0 %1981
        %v1983 = vmul.f32 %v1982, %v627
        %v1984 = vsub.f32 %v1979, %v1983
        %v1985 = vmul.f32 %v1984, %v1984
        %v1986 = vsel %vm623, %v1985, 0.0
        %1987 = vadd.xlane.f32.xlu0 %v1986
        %v1988 = vpop.xlane.xlu0 %1987
        %v1989 = vmul.f32 %v1988, %v627
        %v1990 = vadd.f32 %v1989, 1e-05
        %v1991 = vrsqrt.pop %v1990
        %v1992 = vmul.f32 %v1984, %v1991
        %v1993 = vlaneseq
        %v1994 = vshrl.u32 %v1993, 7
        %v1995 = vsub.s32 2, %v1994
        %v1996 = vrot.slane %v1428, %v1995
        %v1997 = vmul.f32 %v1992, %v1996
        %v1998 = vlaneseq
        %v1999 = vshrl.u32 %v1998, 7
        %v2000 = vsub.s32 3, %v1999
        %v2001 = vrot.slane %v1428, %v2000
        %v2002 = vadd.f32 %v1997, %v2001
        %s2003 = scalar_lea.vmem %s9, 32
        %v2004 = vld [vmem:[%s2003] sm:$0xf]
        %v2005 = vld [vmem:[%s2003 + $0x4] sm:$0xf]
        %v2006 = vld [vmem:[%s2003 + $0x8] sm:$0xf]
        %v2007 = vld [vmem:[%s2003 + $0xc] sm:$0xf]
        %v2008 = vld [vmem:[%s2003 + $0x10] sm:$0xf]
        %v2009 = vld [vmem:[%s2003 + $0x14] sm:$0xf]
        %v2010 = vld [vmem:[%s2003 + $0x18] sm:$0xf]
        %v2011 = vld [vmem:[%s2003 + $0x1c] sm:$0xf]
        %s2012 = scalar_lea.vmem %s10, 1
        %v2013 = vld [vmem:[%s2012] sm:$0x1]
        %v2014 = vpack.c.bf16 %v2002, %v2002
        %v2016 = vlaneseq
        %v2017 = vshrl.u32 %v2016, 7
        %v2018 = vsub.s32 0, %v2017
        %v2019 = vrot.slane %v2013, %v2018
        %v2029 = vunpack.c.l.b16 %v2004
        %v2030 = vunpack.c.l.b16 %v2005
        %v2031 = vunpack.c.l.b16 %v2006
        %v2032 = vunpack.c.l.b16 %v2007
        %v2033 = vunpack.c.l.b16 %v2008
        %v2034 = vunpack.c.l.b16 %v2009
        %v2035 = vunpack.c.l.b16 %v2010
        %v2036 = vunpack.c.l.b16 %v2011
        %v2037 = vpack.c.b16 %v2030, %v2029
        %v2038 = vpack.c.b16 %v2032, %v2031
        %v2039 = vpack.c.b16 %v2034, %v2033
        %v2040 = vpack.c.b16 %v2036, %v2035
        %v2046 = vsel %vm578, %v2014, 0
        %2048 = vmatprep.subr.bf16.mxu0 0
        %2049 = vmatpush1.bf16.msra.mxu0 %v2037
        %2050 = vmatprep.subr.bf16.mxu0 0
        %2051 = vmatpush1.bf16.msra.mxu0 %v2038
        %2052 = vmatprep.subr.bf16.mxu0 0
        %2053 = vmatpush1.bf16.msra.mxu0 %v2039
        %2054 = vmatprep.subr.bf16.mxu0 0
        %2055 = vmatpush1.bf16.msra.mxu0 %v2040
        %2056 = vmatprep.subr.bf16.mxu0 0
        %2057 = vmatpush1.bf16.msra.mxu0 0
        %2058 = vmatprep.subr.bf16.mxu0 0
        %2059 = vmatpush1.bf16.msra.mxu0 0
        %2060 = vmatprep.subr.bf16.mxu0 0
        %2061 = vmatpush1.bf16.msra.mxu0 0
        %2062 = vmatprep.subr.bf16.mxu0 0
        %2063 = vmatpush1.bf16.msra.mxu0 0
        %2064 = vmatprep.subr.bf16.mxu0 0
        %2065 = vmatpush1.bf16.msra.mxu0 0
        %2066 = vmatprep.subr.bf16.mxu0 0
        %2067 = vmatpush1.bf16.msra.mxu0 0
        %2068 = vmatprep.subr.bf16.mxu0 0
        %2069 = vmatpush1.bf16.msra.mxu0 0
        %2070 = vmatprep.subr.bf16.mxu0 0
        %2071 = vmatpush1.bf16.msra.mxu0 0
        %2072 = vmatprep.subr.bf16.mxu0 0
        %2073 = vmatpush1.bf16.msra.mxu0 0
        %2074 = vmatprep.subr.bf16.mxu0 0
        %2075 = vmatpush1.bf16.msra.mxu0 0
        %2076 = vmatprep.subr.bf16.mxu0 0
        %2077 = vmatpush1.bf16.msra.mxu0 0
        %2078 = vmatprep.subr.bf16.mxu0 0
        %2079 = vmatpush1.bf16.msra.mxu0 0
        %2080 = vmatprep.mubr.bf16.mxu0 0
        %2081 = vmatmul.mubr.bf16.gmra.mrb[0].mxu0 %v2046
        %v2082 = vpop.f32.mrb[0].mxu0
        %v2083 = vadd.f32 %v2019, %v2082
        %v2084 = vpop.f32.mrb[0].mxu0
        %v2085 = vpop.f32.mrb[0].mxu0
        %v2086 = vpop.f32.mrb[0].mxu0
        %2087 = vdwg.mxu0
        %v2088 = vmul.f32 %v2083, 1.702
        %v2089 = vxor.u32 %v2088, 2147483648
        %v2090 = vmul.f32 %v2089, 1.442695
        %v2091 = vpow.pop %v2090
        %v2092 = vadd.f32 %v2091, 1.0
        %v2093 = vrcp.pop %v2092
        %v2094 = vmul.f32 1.0, %v2093
        %v2095 = vmul.f32 %v2083, %v2094
        %s2096 = scalar_lea.vmem %s11, 64
        %v2097 = vld [vmem:[%s2096] sm:$0xf]
        %v2098 = vld [vmem:[%s2096 + $0x4] sm:$0xf]
        %v2099 = vld [vmem:[%s2096 + $0x8] sm:$0xf]
        %v2100 = vld [vmem:[%s2096 + $0xc] sm:$0xf]
        %v2101 = vld [vmem:[%s2096 + $0x10] sm:$0xf]
        %v2102 = vld [vmem:[%s2096 + $0x14] sm:$0xf]
        %v2103 = vld [vmem:[%s2096 + $0x18] sm:$0xf]
        %v2104 = vld [vmem:[%s2096 + $0x1c] sm:$0xf]
        %v2105 = vld [vmem:[%s2096 + $0x20] sm:$0xf]
        %v2106 = vld [vmem:[%s2096 + $0x24] sm:$0xf]
        %v2107 = vld [vmem:[%s2096 + $0x28] sm:$0xf]
        %v2108 = vld [vmem:[%s2096 + $0x2c] sm:$0xf]
        %v2109 = vld [vmem:[%s2096 + $0x30] sm:$0xf]
        %v2110 = vld [vmem:[%s2096 + $0x34] sm:$0xf]
        %v2111 = vld [vmem:[%s2096 + $0x38] sm:$0xf]
        %v2112 = vld [vmem:[%s2096 + $0x3c] sm:$0xf]
        %s2113 = scalar_lea.vmem %s12, 1
        %v2114 = vld [vmem:[%s2113] sm:$0x1]
        %v2115 = vpack.c.bf16 %v2095, %v2095
        %v2117 = vlaneseq
        %v2118 = vshrl.u32 %v2117, 7
        %v2119 = vsub.s32 0, %v2118
        %v2120 = vrot.slane %v2114, %v2119
        %v2138 = vunpack.c.l.b16 %v2097
        %v2139 = vunpack.c.l.b16 %v2098
        %v2140 = vunpack.c.l.b16 %v2099
        %v2141 = vunpack.c.l.b16 %v2100
        %v2142 = vunpack.c.l.b16 %v2101
        %v2143 = vunpack.c.l.b16 %v2102
        %v2144 = vunpack.c.l.b16 %v2103
        %v2145 = vunpack.c.l.b16 %v2104
        %v2146 = vunpack.c.l.b16 %v2105
        %v2147 = vunpack.c.l.b16 %v2106
        %v2148 = vunpack.c.l.b16 %v2107
        %v2149 = vunpack.c.l.b16 %v2108
        %v2150 = vunpack.c.l.b16 %v2109
        %v2151 = vunpack.c.l.b16 %v2110
        %v2152 = vunpack.c.l.b16 %v2111
        %v2153 = vunpack.c.l.b16 %v2112
        %v2154 = vpack.c.b16 %v2139, %v2138
        %v2155 = vpack.c.b16 %v2141, %v2140
        %v2156 = vpack.c.b16 %v2143, %v2142
        %v2157 = vpack.c.b16 %v2145, %v2144
        %v2158 = vpack.c.b16 %v2147, %v2146
        %v2159 = vpack.c.b16 %v2149, %v2148
        %v2160 = vpack.c.b16 %v2151, %v2150
        %v2161 = vpack.c.b16 %v2153, %v2152
        %2170 = vmatprep.subr.bf16.mxu0 0
        %2171 = vmatpush1.bf16.msra.mxu0 %v2154
        %2172 = vmatprep.subr.bf16.mxu0 0
        %2173 = vmatpush1.bf16.msra.mxu0 %v2155
        %2174 = vmatprep.subr.bf16.mxu0 0
        %2175 = vmatpush1.bf16.msra.mxu0 %v2156
        %2176 = vmatprep.subr.bf16.mxu0 0
        %2177 = vmatpush1.bf16.msra.mxu0 %v2157
        %2178 = vmatprep.subr.bf16.mxu0 0
        %2179 = vmatpush1.bf16.msra.mxu0 %v2158
        %2180 = vmatprep.subr.bf16.mxu0 0
        %2181 = vmatpush1.bf16.msra.mxu0 %v2159
        %2182 = vmatprep.subr.bf16.mxu0 0
        %2183 = vmatpush1.bf16.msra.mxu0 %v2160
        %2184 = vmatprep.subr.bf16.mxu0 0
        %2185 = vmatpush1.bf16.msra.mxu0 %v2161
        %2186 = vmatprep.subr.bf16.mxu0 0
        %2187 = vmatpush1.bf16.msra.mxu0 0
        %2188 = vmatprep.subr.bf16.mxu0 0
        %2189 = vmatpush1.bf16.msra.mxu0 0
        %2190 = vmatprep.subr.bf16.mxu0 0
        %2191 = vmatpush1.bf16.msra.mxu0 0
        %2192 = vmatprep.subr.bf16.mxu0 0
        %2193 = vmatpush1.bf16.msra.mxu0 0
        %2194 = vmatprep.subr.bf16.mxu0 0
        %2195 = vmatpush1.bf16.msra.mxu0 0
        %2196 = vmatprep.subr.bf16.mxu0 0
        %2197 = vmatpush1.bf16.msra.mxu0 0
        %2198 = vmatprep.subr.bf16.mxu0 0
        %2199 = vmatpush1.bf16.msra.mxu0 0
        %2200 = vmatprep.subr.bf16.mxu0 0
        %2201 = vmatpush1.bf16.msra.mxu0 0
        %2202 = vmatprep.mubr.bf16.mxu0 0
        %2203 = vmatmul.mubr.bf16.gmra.mrb[0].mxu0 %v2115
        %v2204 = vpop.f32.mrb[0].mxu0
        %v2205 = vadd.f32 %v2120, %v2204
        %v2206 = vpop.f32.mrb[0].mxu0
        %v2207 = vpop.f32.mrb[0].mxu0
        %v2208 = vpop.f32.mrb[0].mxu0
        %2209 = vdwg.mxu0
        %v2210 = vadd.f32 %v1979, %v2205
        %2211 = vst.msk [vmem:[%s475] sm:$0x1f] %vm623, %v2210
        %vm2212 = vcmask 516096
        %v2213 = vsel %vm2212, %v2210, 0.0
        %2214 = vadd.xlane.f32.xlu0 %v2213
        %v2215 = vpop.xlane.xlu0 %2214
        %v2216 = vmul.f32 %v2215, %v627
        %v2217 = vsub.f32 %v2210, %v2216
        %v2218 = vmul.f32 %v2217, %v2217
        %v2219 = vsel %vm2212, %v2218, 0.0
        %2220 = vadd.xlane.f32.xlu0 %v2219
        %v2221 = vpop.xlane.xlu0 %2220
        %v2222 = vmul.f32 %v2221, %v627
        %v2223 = vadd.f32 %v2222, 1e-05
        %v2224 = vrsqrt.pop %v2223
        %v2225 = vmul.f32 %v2217, %v2224
        %v2227 = vrot.slane %v622, 2
        %v2229 = vmul.f32 %v2225, %v2227
        %v2230 = vrot.slane %v622, 3
        %v2232 = vadd.f32 %v2229, %v2230
        %2233 = vst.msk [vmem:[%s466] sm:$0x1] %vm2212, %v2232
        %p2234 = scmp.lt.s32.totalorder %s29, 1
        %s2235 = scalar_select %p2234, %s29, 1
        %s2236 = smul.addr %s2235, 8
        %s2237 = scalar_lea.vmem %s13, %s2236
        %s2238 = sand.u32 %s341, 1
        %s2239 = scalar_lea.sflag [#allocation3], %s2238
        %s2240 = sand.u32 %s341, 1
        %s2241 = scalar_lea.vmem [#allocation2], %s2240
        // Predicated region
        $region73: #{clip_vision_forward.1} parent=71 // pred_check
          %p2242 = pneg %p325
        $region74: #{clip_vision_forward.1} parent=71 // pred_check_branch
          %2244 = sbr.rel (%p2242) target = $region76
        $region75: #{clip_vision_forward.1} parent=71 // pred_region
          _
        $region76: #{clip_vision_forward.1} parent=71 // pred_fallthru
          _
        // Predicated region
        $region77: #{clip_vision_forward.1} parent=71 // pred_check
          %p2245 = pneg %p351
        $region78: #{clip_vision_forward.1} parent=71 // pred_check_branch
          %2247 = sbr.rel (%p2245) target = $region80
        $region79: #{clip_vision_forward.1} parent=71 // pred_region
          %s2249 = ssub.s32 16, 16
          %2250 = vsyncadd %s2239, %s2249
          %s2251 = smul.addr %s29, 16
          %s2252 = scalar_lea.hbm %s14, %s2251
          %s2254 = sshll.u32 %s2241, 4
          %s2255 = int_to_ptr.vmem [resolvable:$true] %s2254
          %2257 = dma.vmem_to_hbm [thread:$0]  %s2255, 16, %s2252, %s2239
        $region80: #{clip_vision_forward.1} parent=71 // pred_fallthru
          _
      $region72: #{clip_vision_forward.1} parent=5 // pred_fallthru
        _
      %p2258 = scmp.le.s32.totalorder 2, %s24
      // Predicated region
      $region81: #{clip_vision_forward.1} parent=5 // pred_check
        %p2259 = pneg %p2258
      $region82: #{clip_vision_forward.1} parent=5 // pred_check_branch
        %2261 = sbr.rel (%p2259) target = $region84
      $region83: #{clip_vision_forward.1} parent=5 // pred_region
        %s2262 = ssub.s32 %s24, 2
        // Predicated region
        $region85: #{clip_vision_forward.1} parent=83 // pred_check
          %p2263 = pneg %p331
        $region86: #{clip_vision_forward.1} parent=83 // pred_check_branch
          %2265 = sbr.rel (%p2263) target = $region88
        $region87: #{clip_vision_forward.1} parent=83 // pred_region
          %p2266 = scmp.lt.s32.totalorder %s30, 1
          %s2267 = scalar_select %p2266, %s30, 1
          %s2268 = smul.addr %s2267, 8
          %s2269 = scalar_lea.vmem %s13, %s2268
        $region88: #{clip_vision_forward.1} parent=83 // pred_fallthru
          _
        // Predicated region
        $region89: #{clip_vision_forward.1} parent=83 // pred_check
          %p2270 = pneg %p357
        $region90: #{clip_vision_forward.1} parent=83 // pred_check_branch
          %2272 = sbr.rel (%p2270) target = $region92
        $region91: #{clip_vision_forward.1} parent=83 // pred_region
          %s2273 = sand.u32 %s342, 1
          %s2274 = scalar_lea.sflag [#allocation3], %s2273
          %s2275 = sand.u32 %s342, 1
          %s2276 = scalar_lea.vmem [#allocation2], %s2275
          %2277 = dma.done %s2274, 16
        $region92: #{clip_vision_forward.1} parent=83 // pred_fallthru
          _
      $region84: #{clip_vision_forward.1} parent=5 // pred_fallthru
        _
    $region6: #{clip_vision_forward.1} parent=1 // loop_footer
      %s28 = sadd.s32 1, %s24
    $region7: #{clip_vision_forward.1} parent=1 // loop_footer_branch
      %23 = sbr.rel target = $region3
    $region8: #{clip_vision_forward.1} parent=1 // loop_exit
      _
    %2278 = vsyncpa [#allocation3], 1
    %s2279 = scalar_lea.sflag [#allocation3], 1
    %2280 = vsyncpa %s2279, 1

</llo_original>
